<compile_context>
chip_gen: v7x
topology: tpu7x:2x2x1
jax: 0.10.0
libtpu: 0.0.40
codegen_flags: <defaults>
</compile_context>

<pallas_src>
import jax
import jax.numpy as jnp
import numpy as np
from jax.experimental import pallas as pl
from jax.experimental.pallas import tpu as pltpu

EPS = 1e-5


def resblock_kernel(x_ref, m_ref, sup_ref, sdn_ref, bias_ref, gamma_ref,
                    beta_ref, fold_ref, unfold_ref, out_ref):
    rows, wc = x_ref.shape                 # rows = N*H, wc = W*C (lane-dense)
    c = fold_ref.shape[1]
    inv_count = 1.0 / (rows * (wc // c))   # 1 / (N*H*W) for BN stats

    # Hoisted loads (tiny, reused by both conv/BN layers).
    x = x_ref[...]                         # [N*H, W*C]  lane-packed input
    s_up = sup_ref[...]                    # [N*H, N*H]  row shift (h-1, 0 at h==0)
    s_dn = sdn_ref[...]                    # [N*H, N*H]  row shift (h+1, 0 at h==H-1)
    fold = fold_ref[...]                   # [W*C, C]    lane -> channel fold
    unfold = unfold_ref[...]               # [C, W*C]    channel -> lane unfold
    bias = bias_ref[...]                   # [2, W*C]    conv bias, lane-tiled
    gamma = gamma_ref[...]                 # [2, W*C]    BN gamma, lane-tiled
    beta = beta_ref[...]                   # [2, W*C]    BN beta,  lane-tiled

    def conv3x3_bn(act, layer):
        """3x3 / stride-1 / pad-1 conv as ONE K=3*W*C MXU dot against a
        block-banded weight matrix, followed by training-mode BatchNorm."""
        # Row shifts (H direction) on the MXU; boundaries/padding are zeros
        # baked into s_up / s_dn, so no masks, no staging buffer, no relayout.
        above = jnp.dot(s_up, act, preferred_element_type=jnp.float32)   # x[h-1]
        below = jnp.dot(s_dn, act, preferred_element_type=jnp.float32)   # x[h+1]
        # Lane-dim concat at 128-aligned offsets -> im2col-style lhs, K=3*W*C.
        lhs = jnp.concatenate([above, act, below], axis=1)               # [rows, 3*W*C]
        acc = jnp.dot(lhs, m_ref[layer],
                      preferred_element_type=jnp.float32)                # [rows, W*C]
        acc = acc + bias[layer:layer + 1, :]

        # Two-pass BN stats (biased var, eps=1e-5), per channel over (N,H,W).
        mean_c = jnp.dot(jnp.sum(acc, axis=0, keepdims=True), fold) * inv_count   # [1, C]
        centered = acc - jnp.dot(mean_c, unfold)                                   # [rows, W*C]
        var_c = jnp.dot(jnp.sum(centered * centered, axis=0, keepdims=True),
                        fold) * inv_count                                          # [1, C]
        scale_lane = jax.lax.rsqrt(jnp.dot(var_c, unfold) + EPS) * gamma[layer:layer + 1, :]
        return centered * scale_lane + beta[layer:layer + 1, :]          # one FMA/elem

    y = conv3x3_bn(jnp.maximum(x, 0.0), 0)     # ReLU -> conv1 -> bn1
    y = conv3x3_bn(jnp.maximum(y, 0.0), 1)     # ReLU -> conv2 -> bn2
    out_ref[...] = y + x                        # + residual (lane-dense store)


def resblock(x_nchw, w_hwio, bias, gamma, beta):
    """ResBlock forward.  x: [N, C, H, W] (PyTorch NCHW).
    w_hwio: [2, 3, 3, C, C] (layer, kh, kw, cin, cout); bias/gamma/beta: [2, C].
    Returns NCHW.  Compute runs in the lane-packed [N*H, W*C] layout."""
    x = jnp.transpose(x_nchw, (0, 2, 3, 1)).astype(jnp.float32)   # NHWC
    n, h, w, c = x.shape
    wc = w * c
    rows = n * h
    x_packed = x.reshape(rows, wc)                                 # [N*H, W*C]

    wt = w_hwio.astype(jnp.float32)                                # [2,3,3,C,C] (l,dy,dx,ci,co)
    # Block-banded conv matrices:
    #   M[l, dy*WC + wp*C + ci, wq*C + co] = wt[l, dy, wp-wq+1, ci, co] for |wp-wq|<=1 else 0
    # (the band encodes dx AND the W-direction zero padding).
    band = jnp.stack([jnp.eye(w, k=1 - dx, dtype=jnp.float32) for dx in range(3)])  # [3, W, W]
    m = jnp.einsum('xpq,ldxio->ldpiqo', band, wt).reshape(2, 3 * wc, wc)

    # Row-shift matrices encoding the H-direction zero padding and the image
    # boundaries inside the packed (n, h) row dimension.
    ridx = jnp.arange(rows)
    s_up = jnp.eye(rows, k=-1, dtype=jnp.float32) * (ridx % h != 0).astype(jnp.float32)[:, None]
    s_dn = jnp.eye(rows, k=1, dtype=jnp.float32) * (ridx % h != h - 1).astype(jnp.float32)[:, None]

    # Per-channel fold/unfold between lane layout and channels, plus lane-tiled
    # parameter vectors (hoisted parameter prep happens here, not in-kernel).
    fold = jnp.tile(jnp.eye(c, dtype=jnp.float32), (w, 1))          # [W*C, C]
    unfold = fold.T                                                  # [C, W*C]
    bias_lane = jnp.tile(bias.astype(jnp.float32), (1, w))           # [2, W*C]
    gamma_lane = jnp.tile(gamma.astype(jnp.float32), (1, w))         # [2, W*C]
    beta_lane = jnp.tile(beta.astype(jnp.float32), (1, w))           # [2, W*C]

    out_packed = pl.pallas_call(
        resblock_kernel,
        out_shape=jax.ShapeDtypeStruct((rows, wc), jnp.float32),     # lane-dense out spec
        in_specs=[pl.BlockSpec(memory_space=pltpu.MemorySpace.VMEM)] * 9,
        out_specs=pl.BlockSpec(memory_space=pltpu.MemorySpace.VMEM),
    )(x_packed, m, s_up, s_dn, bias_lane, gamma_lane, beta_lane, fold, unfold)

    return jnp.transpose(out_packed.reshape(n, h, w, c), (0, 3, 1, 2))


def reference(x_nchw, w_hwio, bias, gamma, beta):
    """Pure-JAX reference with identical semantics (correctness check)."""
    x = jnp.transpose(x_nchw, (0, 2, 3, 1)).astype(jnp.float32)
    dn = ('NHWC', 'HWIO', 'NHWC')

    def conv(hh, k, b):
        y = jax.lax.conv_general_dilated(hh, k, (1, 1), [(1, 1), (1, 1)],
                                         dimension_numbers=dn,
                                         precision=jax.lax.Precision.HIGHEST)
        return y + b

    def bn(hh, g, bt):
        m = jnp.mean(hh, axis=(0, 1, 2), keepdims=True)
        v = jnp.mean((hh - m) ** 2, axis=(0, 1, 2), keepdims=True)
        return (hh - m) * jax.lax.rsqrt(v + EPS) * g + bt

    y = jax.nn.relu(x)
    y = conv(y, w_hwio[0], bias[0])
    y = bn(y, gamma[0], beta[0])
    y = jax.nn.relu(y)
    y = conv(y, w_hwio[1], bias[1])
    y = bn(y, gamma[1], beta[1])
    y = y + x
    return jnp.transpose(y, (0, 3, 1, 2))


if __name__ == "__main__":
    key = jax.random.PRNGKey(0)
    ks = jax.random.split(key, 5)
    N, C, H = 2, 8, 16    # W = H; W*C = 128 -> exactly one lane-dense vreg row

    # Deterministic synthetic parameters (shapes follow ResBlock.__init__).
    x = jax.random.normal(ks[0], (N, C, H, H), jnp.float32)               # NCHW input
    w = 0.2 * jax.random.normal(ks[1], (2, 3, 3, C, C), jnp.float32)      # conv1/conv2 (HWIO)
    bias = 0.1 * jax.random.normal(ks[2], (2, C), jnp.float32)            # conv biases
    gamma = 1.0 + 0.1 * jax.random.normal(ks[3], (2, C), jnp.float32)     # bn1/bn2 weight
    beta = 0.1 * jax.random.normal(ks[4], (2, C), jnp.float32)            # bn1/bn2 bias

    out = jax.block_until_ready(resblock(x, w, bias, gamma, beta))
    ref = jax.block_until_ready(reference(x, w, bias, gamma, beta))

    ok = (out.shape == ref.shape) and np.allclose(
        np.asarray(out), np.asarray(ref), rtol=1e-3, atol=1e-3)
    if ok:
        print("KERNEL_OK")
    else:
        print("KERNEL_MISMATCH",
              float(np.max(np.abs(np.asarray(out) - np.asarray(ref)))))
</pallas_src>

<mosaic_0001>
module attributes {stable_mosaic.version = 11 : i64} {
  func.func @resblock_kernel(%arg0: memref<32x128xf32, #tpu.memory_space<vmem>>, %arg1: memref<2x384x128xf32, #tpu.memory_space<vmem>>, %arg2: memref<32x32xf32, #tpu.memory_space<vmem>>, %arg3: memref<32x32xf32, #tpu.memory_space<vmem>>, %arg4: memref<2x128xf32, #tpu.memory_space<vmem>>, %arg5: memref<2x128xf32, #tpu.memory_space<vmem>>, %arg6: memref<2x128xf32, #tpu.memory_space<vmem>>, %arg7: memref<128x8xf32, #tpu.memory_space<vmem>>, %arg8: memref<8x128xf32, #tpu.memory_space<vmem>>, %arg9: memref<32x128xf32, #tpu.memory_space<vmem>>) attributes {dimension_semantics = [], scalar_prefetch = 0 : i64, scratch_operands = 0 : i64, tpu.core_type = #tpu.core_type<tc>} {
    %c0 = arith.constant 0 : index
    %c0_0 = arith.constant 0 : index
    %0 = vector.load %arg0[%c0, %c0_0] : memref<32x128xf32, #tpu.memory_space<vmem>>, vector<32x128xf32>
    %c0_1 = arith.constant 0 : index
    %c0_2 = arith.constant 0 : index
    %1 = vector.load %arg2[%c0_1, %c0_2] : memref<32x32xf32, #tpu.memory_space<vmem>>, vector<32x32xf32>
    %c0_3 = arith.constant 0 : index
    %c0_4 = arith.constant 0 : index
    %2 = vector.load %arg3[%c0_3, %c0_4] : memref<32x32xf32, #tpu.memory_space<vmem>>, vector<32x32xf32>
    %c0_5 = arith.constant 0 : index
    %c0_6 = arith.constant 0 : index
    %3 = vector.load %arg7[%c0_5, %c0_6] : memref<128x8xf32, #tpu.memory_space<vmem>>, vector<128x8xf32>
    %c0_7 = arith.constant 0 : index
    %c0_8 = arith.constant 0 : index
    %4 = vector.load %arg8[%c0_7, %c0_8] : memref<8x128xf32, #tpu.memory_space<vmem>>, vector<8x128xf32>
    %c0_9 = arith.constant 0 : index
    %c0_10 = arith.constant 0 : index
    %5 = vector.load %arg4[%c0_9, %c0_10] : memref<2x128xf32, #tpu.memory_space<vmem>>, vector<2x128xf32>
    %c0_11 = arith.constant 0 : index
    %c0_12 = arith.constant 0 : index
    %6 = vector.load %arg5[%c0_11, %c0_12] : memref<2x128xf32, #tpu.memory_space<vmem>>, vector<2x128xf32>
    %c0_13 = arith.constant 0 : index
    %c0_14 = arith.constant 0 : index
    %7 = vector.load %arg6[%c0_13, %c0_14] : memref<2x128xf32, #tpu.memory_space<vmem>>, vector<2x128xf32>
    %cst = arith.constant 0.000000e+00 : f32
    %8 = vector.broadcast %cst : f32 to vector<32x128xf32>
    %9 = arith.maximumf %0, %8 : vector<32x128xf32>
    %cst_15 = arith.constant dense<0.000000e+00> : vector<32x128xf32>
    %10 = tpu.matmul %1, %9, %cst_15 {dimension_numbers = #tpu.dot_dimension_numbers<[1], [0], [0], [1], [0, 0, 1, 1], [], []>} : vector<32x32xf32>, vector<32x128xf32>, vector<32x128xf32> -> vector<32x128xf32>
    %cst_16 = arith.constant dense<0.000000e+00> : vector<32x128xf32>
    %11 = tpu.matmul %2, %9, %cst_16 {dimension_numbers = #tpu.dot_dimension_numbers<[1], [0], [0], [1], [0, 0, 1, 1], [], []>} : vector<32x32xf32>, vector<32x128xf32>, vector<32x128xf32> -> vector<32x128xf32>
    %12 = tpu.concatenate %10, %9, %11 in 1 : vector<32x128xf32>, vector<32x128xf32>, vector<32x128xf32> -> vector<32x384xf32>
    %c0_17 = arith.constant 0 : index
    %c0_18 = arith.constant 0 : index
    %c0_19 = arith.constant 0 : index
    %13 = vector.load %arg1[%c0_17, %c0_18, %c0_19] : memref<2x384x128xf32, #tpu.memory_space<vmem>>, vector<1x384x128xf32>
    %14 = vector.shape_cast %13 : vector<1x384x128xf32> to vector<384x128xf32>
    %cst_20 = arith.constant dense<0.000000e+00> : vector<32x128xf32>
    %15 = tpu.matmul %12, %14, %cst_20 {dimension_numbers = #tpu.dot_dimension_numbers<[1], [0], [0], [1], [0, 0, 1, 1], [], []>} : vector<32x384xf32>, vector<384x128xf32>, vector<32x128xf32> -> vector<32x128xf32>
    %16 = vector.extract_strided_slice %5 {offsets = [0, 0], sizes = [1, 128], strides = [1, 1]} : vector<2x128xf32> to vector<1x128xf32>
    %17 = vector.broadcast %16 : vector<1x128xf32> to vector<32x128xf32>
    %18 = arith.addf %15, %17 : vector<32x128xf32>
    %cst_21 = arith.constant dense<0.000000e+00> : vector<128xf32>
    %19 = vector.multi_reduction <add>, %18, %cst_21 [0] : vector<32x128xf32> to vector<128xf32>
    %20 = vector.shape_cast %19 : vector<128xf32> to vector<1x128xf32>
    %cst_22 = arith.constant dense<0.000000e+00> : vector<1x8xf32>
    %21 = tpu.matmul %20, %3, %cst_22 {dimension_numbers = #tpu.dot_dimension_numbers<[1], [0], [0], [1], [0, 0, 1, 1], [], []>} : vector<1x128xf32>, vector<128x8xf32>, vector<1x8xf32> -> vector<1x8xf32>
    %cst_23 = arith.constant 0.001953125 : f32
    %22 = vector.broadcast %cst_23 : f32 to vector<1x8xf32>
    %23 = arith.mulf %21, %22 : vector<1x8xf32>
    %cst_24 = arith.constant dense<0.000000e+00> : vector<1x128xf32>
    %24 = tpu.matmul %23, %4, %cst_24 {dimension_numbers = #tpu.dot_dimension_numbers<[1], [0], [0], [1], [0, 0, 1, 1], [], []>} : vector<1x8xf32>, vector<8x128xf32>, vector<1x128xf32> -> vector<1x128xf32>
    %25 = vector.broadcast %24 : vector<1x128xf32> to vector<32x128xf32>
    %26 = arith.subf %18, %25 : vector<32x128xf32>
    %27 = arith.mulf %26, %26 : vector<32x128xf32>
    %cst_25 = arith.constant dense<0.000000e+00> : vector<128xf32>
    %28 = vector.multi_reduction <add>, %27, %cst_25 [0] : vector<32x128xf32> to vector<128xf32>
    %29 = vector.shape_cast %28 : vector<128xf32> to vector<1x128xf32>
    %cst_26 = arith.constant dense<0.000000e+00> : vector<1x8xf32>
    %30 = tpu.matmul %29, %3, %cst_26 {dimension_numbers = #tpu.dot_dimension_numbers<[1], [0], [0], [1], [0, 0, 1, 1], [], []>} : vector<1x128xf32>, vector<128x8xf32>, vector<1x8xf32> -> vector<1x8xf32>
    %cst_27 = arith.constant 0.001953125 : f32
    %31 = vector.broadcast %cst_27 : f32 to vector<1x8xf32>
    %32 = arith.mulf %30, %31 : vector<1x8xf32>
    %cst_28 = arith.constant dense<0.000000e+00> : vector<1x128xf32>
    %33 = tpu.matmul %32, %4, %cst_28 {dimension_numbers = #tpu.dot_dimension_numbers<[1], [0], [0], [1], [0, 0, 1, 1], [], []>} : vector<1x8xf32>, vector<8x128xf32>, vector<1x128xf32> -> vector<1x128xf32>
    %cst_29 = arith.constant 9.99999974E-6 : f32
    %34 = vector.broadcast %cst_29 : f32 to vector<1x128xf32>
    %35 = arith.addf %33, %34 : vector<1x128xf32>
    %36 = math.rsqrt %35 : vector<1x128xf32>
    %37 = vector.extract_strided_slice %6 {offsets = [0, 0], sizes = [1, 128], strides = [1, 1]} : vector<2x128xf32> to vector<1x128xf32>
    %38 = arith.mulf %36, %37 : vector<1x128xf32>
    %39 = vector.broadcast %38 : vector<1x128xf32> to vector<32x128xf32>
    %40 = arith.mulf %26, %39 : vector<32x128xf32>
    %41 = vector.extract_strided_slice %7 {offsets = [0, 0], sizes = [1, 128], strides = [1, 1]} : vector<2x128xf32> to vector<1x128xf32>
    %42 = vector.broadcast %41 : vector<1x128xf32> to vector<32x128xf32>
    %43 = arith.addf %40, %42 : vector<32x128xf32>
    %cst_30 = arith.constant 0.000000e+00 : f32
    %44 = vector.broadcast %cst_30 : f32 to vector<32x128xf32>
    %45 = arith.maximumf %43, %44 : vector<32x128xf32>
    %cst_31 = arith.constant dense<0.000000e+00> : vector<32x128xf32>
    %46 = tpu.matmul %1, %45, %cst_31 {dimension_numbers = #tpu.dot_dimension_numbers<[1], [0], [0], [1], [0, 0, 1, 1], [], []>} : vector<32x32xf32>, vector<32x128xf32>, vector<32x128xf32> -> vector<32x128xf32>
    %cst_32 = arith.constant dense<0.000000e+00> : vector<32x128xf32>
    %47 = tpu.matmul %2, %45, %cst_32 {dimension_numbers = #tpu.dot_dimension_numbers<[1], [0], [0], [1], [0, 0, 1, 1], [], []>} : vector<32x32xf32>, vector<32x128xf32>, vector<32x128xf32> -> vector<32x128xf32>
    %48 = tpu.concatenate %46, %45, %47 in 1 : vector<32x128xf32>, vector<32x128xf32>, vector<32x128xf32> -> vector<32x384xf32>
    %c1 = arith.constant 1 : index
    %c0_33 = arith.constant 0 : index
    %c0_34 = arith.constant 0 : index
    %49 = vector.load %arg1[%c1, %c0_33, %c0_34] : memref<2x384x128xf32, #tpu.memory_space<vmem>>, vector<1x384x128xf32>
    %50 = vector.shape_cast %49 : vector<1x384x128xf32> to vector<384x128xf32>
    %cst_35 = arith.constant dense<0.000000e+00> : vector<32x128xf32>
    %51 = tpu.matmul %48, %50, %cst_35 {dimension_numbers = #tpu.dot_dimension_numbers<[1], [0], [0], [1], [0, 0, 1, 1], [], []>} : vector<32x384xf32>, vector<384x128xf32>, vector<32x128xf32> -> vector<32x128xf32>
    %52 = vector.extract_strided_slice %5 {offsets = [1, 0], sizes = [1, 128], strides = [1, 1]} : vector<2x128xf32> to vector<1x128xf32>
    %53 = vector.broadcast %52 : vector<1x128xf32> to vector<32x128xf32>
    %54 = arith.addf %51, %53 : vector<32x128xf32>
    %cst_36 = arith.constant dense<0.000000e+00> : vector<128xf32>
    %55 = vector.multi_reduction <add>, %54, %cst_36 [0] : vector<32x128xf32> to vector<128xf32>
    %56 = vector.shape_cast %55 : vector<128xf32> to vector<1x128xf32>
    %cst_37 = arith.constant dense<0.000000e+00> : vector<1x8xf32>
    %57 = tpu.matmul %56, %3, %cst_37 {dimension_numbers = #tpu.dot_dimension_numbers<[1], [0], [0], [1], [0, 0, 1, 1], [], []>} : vector<1x128xf32>, vector<128x8xf32>, vector<1x8xf32> -> vector<1x8xf32>
    %cst_38 = arith.constant 0.001953125 : f32
    %58 = vector.broadcast %cst_38 : f32 to vector<1x8xf32>
    %59 = arith.mulf %57, %58 : vector<1x8xf32>
    %cst_39 = arith.constant dense<0.000000e+00> : vector<1x128xf32>
    %60 = tpu.matmul %59, %4, %cst_39 {dimension_numbers = #tpu.dot_dimension_numbers<[1], [0], [0], [1], [0, 0, 1, 1], [], []>} : vector<1x8xf32>, vector<8x128xf32>, vector<1x128xf32> -> vector<1x128xf32>
    %61 = vector.broadcast %60 : vector<1x128xf32> to vector<32x128xf32>
    %62 = arith.subf %54, %61 : vector<32x128xf32>
    %63 = arith.mulf %62, %62 : vector<32x128xf32>
    %cst_40 = arith.constant dense<0.000000e+00> : vector<128xf32>
    %64 = vector.multi_reduction <add>, %63, %cst_40 [0] : vector<32x128xf32> to vector<128xf32>
    %65 = vector.shape_cast %64 : vector<128xf32> to vector<1x128xf32>
    %cst_41 = arith.constant dense<0.000000e+00> : vector<1x8xf32>
    %66 = tpu.matmul %65, %3, %cst_41 {dimension_numbers = #tpu.dot_dimension_numbers<[1], [0], [0], [1], [0, 0, 1, 1], [], []>} : vector<1x128xf32>, vector<128x8xf32>, vector<1x8xf32> -> vector<1x8xf32>
    %cst_42 = arith.constant 0.001953125 : f32
    %67 = vector.broadcast %cst_42 : f32 to vector<1x8xf32>
    %68 = arith.mulf %66, %67 : vector<1x8xf32>
    %cst_43 = arith.constant dense<0.000000e+00> : vector<1x128xf32>
    %69 = tpu.matmul %68, %4, %cst_43 {dimension_numbers = #tpu.dot_dimension_numbers<[1], [0], [0], [1], [0, 0, 1, 1], [], []>} : vector<1x8xf32>, vector<8x128xf32>, vector<1x128xf32> -> vector<1x128xf32>
    %cst_44 = arith.constant 9.99999974E-6 : f32
    %70 = vector.broadcast %cst_44 : f32 to vector<1x128xf32>
    %71 = arith.addf %69, %70 : vector<1x128xf32>
    %72 = math.rsqrt %71 : vector<1x128xf32>
    %73 = vector.extract_strided_slice %6 {offsets = [1, 0], sizes = [1, 128], strides = [1, 1]} : vector<2x128xf32> to vector<1x128xf32>
    %74 = arith.mulf %72, %73 : vector<1x128xf32>
    %75 = vector.broadcast %74 : vector<1x128xf32> to vector<32x128xf32>
    %76 = arith.mulf %62, %75 : vector<32x128xf32>
    %77 = vector.extract_strided_slice %7 {offsets = [1, 0], sizes = [1, 128], strides = [1, 1]} : vector<2x128xf32> to vector<1x128xf32>
    %78 = vector.broadcast %77 : vector<1x128xf32> to vector<32x128xf32>
    %79 = arith.addf %76, %78 : vector<32x128xf32>
    %80 = arith.addf %79, %0 : vector<32x128xf32>
    %c0_45 = arith.constant 0 : index
    %c0_46 = arith.constant 0 : index
    %81 = vector.load %arg9[%c0_45, %c0_46] : memref<32x128xf32, #tpu.memory_space<vmem>>, vector<32x128xf32>
    tpu.vector_store %arg9[%c0_45, %c0_46], %80 {strides = array<i32>} : memref<32x128xf32, #tpu.memory_space<vmem>>, vector<32x128xf32>,
    return
  }
}

</mosaic_0001>

<llo_original>
// kernel: tpu_custom_call.1
$region0: #{tpu_custom_call.1}
  #allocation0 [shape = 'u32[]', space=smem, size = 0x4, offset = 0x4, fixed_abs, tag = 'smem constant byte address 0x4 - core index']
  #allocation1 [shape = 'u32[144,128]{1,0:T(1,128)}', space=vmem, size = 0x12000, scoped, tag = 'internal scratch']
  %s0 = inlined_call_operand.vmem [shape: f32[32,128], index: 0, kind: input, shape index: {}]
  %s1 = inlined_call_operand.hbm [shape: f32[2,384,128], index: 1, kind: input, shape index: {}]
  %s2 = inlined_call_operand.vmem [shape: f32[32,32], index: 2, kind: input, shape index: {}]
  %s3 = inlined_call_operand.vmem [shape: f32[32,32], index: 3, kind: input, shape index: {}]
  %s4 = inlined_call_operand.vmem [shape: f32[2,128], index: 4, kind: input, shape index: {}]
  %s5 = inlined_call_operand.vmem [shape: f32[2,128], index: 5, kind: input, shape index: {}]
  %s6 = inlined_call_operand.vmem [shape: f32[2,128], index: 6, kind: input, shape index: {}]
  %s7 = inlined_call_operand.vmem [shape: f32[128,8], index: 7, kind: input, shape index: {}]
  %s8 = inlined_call_operand.vmem [shape: f32[8,128], index: 8, kind: input, shape index: {}]
  %s9 = inlined_call_operand.hbm [shape: f32[32,128], index: 9, kind: output, shape index: {}]
  %s10 = sld [smem:[#allocation0]]
  $region50: #{tpu_custom_call.1} parent=0
    _
  %s12 = ssub.s32 1, %s10
  %s13 = scalar_select 0, %s12, %s10
  $region1: #{tpu_custom_call.1} parent=0
    #allocation2 [shape = 'u8[393216]{0}', space=vmem, size = 0x60000, scoped, tag = 'input window, operand 1, single buffered']
    #allocation3 [shape = 's32[1]{0}', space=sflag, size = 0x4, scoped, tag = 'scoped memory for tpu_custom_call.1']
    #allocation4 [shape = 's32[1]{0}', space=sflag, size = 0x4, scoped, tag = 'scoped memory for tpu_custom_call.1']
    #allocation5 [shape = 'u8[16384]{0}', space=vmem, size = 0x4000, scoped, tag = 'output window, operand 0, single buffered']
    %14 = vsyncpa [#allocation3], 0
    %15 = vsyncpa [#allocation4], 0
    // Predicated region
    $region2: #{tpu_custom_call.1} parent=1 // pred_check
      _
    $region3: #{tpu_custom_call.1} parent=1 // pred_check_branch
      %17 = sbr.rel (0) target = $region5
    $region4: #{tpu_custom_call.1} parent=1 // pred_region
      _
    $region5: #{tpu_custom_call.1} parent=1 // pred_fallthru
      _
    // Predicated region
    $region6: #{tpu_custom_call.1} parent=1 // pred_check
      _
    $region7: #{tpu_custom_call.1} parent=1 // pred_check_branch
      %19 = sbr.rel (0) target = $region9
    $region8: #{tpu_custom_call.1} parent=1 // pred_region
      %s21 = ssub.s32 12288, 12288
      %22 = vsyncadd [#allocation3], %s21
      %s23 = sshll.u32 [#allocation2], 4
      %s24 = int_to_ptr.vmem [resolvable:$true] %s23
      %29 = dma.hbm_to_vmem [thread:$0]  %s1, 12288, %s24, [#allocation3], 128, 128, 8
    $region9: #{tpu_custom_call.1} parent=1 // pred_fallthru
      _
    // Predicated region
    $region10: #{tpu_custom_call.1} parent=1 // pred_check
      _
    $region11: #{tpu_custom_call.1} parent=1 // pred_check_branch
      %31 = sbr.rel (0) target = $region13
    $region12: #{tpu_custom_call.1} parent=1 // pred_region
      _
    $region13: #{tpu_custom_call.1} parent=1 // pred_fallthru
      _
    // Predicated region
    $region14: #{tpu_custom_call.1} parent=1 // pred_check
      _
    $region15: #{tpu_custom_call.1} parent=1 // pred_check_branch
      %33 = sbr.rel (0) target = $region17
    $region16: #{tpu_custom_call.1} parent=1 // pred_region
      _
    $region17: #{tpu_custom_call.1} parent=1 // pred_fallthru
      _
    // Predicated region
    $region18: #{tpu_custom_call.1} parent=1 // pred_check
      _
    $region19: #{tpu_custom_call.1} parent=1 // pred_check_branch
      %35 = sbr.rel (0) target = $region21
    $region20: #{tpu_custom_call.1} parent=1 // pred_region
      _
    $region21: #{tpu_custom_call.1} parent=1 // pred_fallthru
      _
    // Predicated region
    $region22: #{tpu_custom_call.1} parent=1 // pred_check
      _
    $region23: #{tpu_custom_call.1} parent=1 // pred_check_branch
      %37 = sbr.rel (0) target = $region25
    $region24: #{tpu_custom_call.1} parent=1 // pred_region
      _
    $region25: #{tpu_custom_call.1} parent=1 // pred_fallthru
      _
    // Predicated region
    $region26: #{tpu_custom_call.1} parent=1 // pred_check
      _
    $region27: #{tpu_custom_call.1} parent=1 // pred_check_branch
      %39 = sbr.rel (0) target = $region29
    $region28: #{tpu_custom_call.1} parent=1 // pred_region
      _
    $region29: #{tpu_custom_call.1} parent=1 // pred_fallthru
      _
    // Predicated region
    $region30: #{tpu_custom_call.1} parent=1 // pred_check
      _
    $region31: #{tpu_custom_call.1} parent=1 // pred_check_branch
      %41 = sbr.rel (0) target = $region33
    $region32: #{tpu_custom_call.1} parent=1 // pred_region
      _
    $region33: #{tpu_custom_call.1} parent=1 // pred_fallthru
      _
    // Predicated region
    $region34: #{tpu_custom_call.1} parent=1 // pred_check
      _
    $region35: #{tpu_custom_call.1} parent=1 // pred_check_branch
      %43 = sbr.rel (0) target = $region37
    $region36: #{tpu_custom_call.1} parent=1 // pred_region
      _
    $region37: #{tpu_custom_call.1} parent=1 // pred_fallthru
      _
    // Predicated region
    $region38: #{tpu_custom_call.1} parent=1 // pred_check
      _
    $region39: #{tpu_custom_call.1} parent=1 // pred_check_branch
      %45 = sbr.rel (0) target = $region41
    $region40: #{tpu_custom_call.1} parent=1 // pred_region
      %46 = dma.done [#allocation3], 12288
    $region41: #{tpu_custom_call.1} parent=1 // pred_fallthru
      _
    %v47 = vld [vmem:[%s0] sm:$0xff]
    %v48 = vld [vmem:[%s0 + $0x8] sm:$0xff]
    %v49 = vld [vmem:[%s0 + $0x10] sm:$0xff]
    %v50 = vld [vmem:[%s0 + $0x18] sm:$0xff]
    %v51 = vld [vmem:[%s2] sm:$0xff]
    %v52 = vld [vmem:[%s2 + $0x8] sm:$0xff]
    %v53 = vld [vmem:[%s2 + $0x10] sm:$0xff]
    %v54 = vld [vmem:[%s2 + $0x18] sm:$0xff]
    %v55 = vld [vmem:[%s3] sm:$0xff]
    %v56 = vld [vmem:[%s3 + $0x8] sm:$0xff]
    %v57 = vld [vmem:[%s3 + $0x10] sm:$0xff]
    %v58 = vld [vmem:[%s3 + $0x18] sm:$0xff]
    %v59 = vld [vmem:[%s7] sm:$0xff]
    %v60 = vld [vmem:[%s7 + $0x8] sm:$0xff]
    %v61 = vld [vmem:[%s7 + $0x10] sm:$0xff]
    %v62 = vld [vmem:[%s7 + $0x18] sm:$0xff]
    %v63 = vld [vmem:[%s7 + $0x20] sm:$0xff]
    %v64 = vld [vmem:[%s7 + $0x28] sm:$0xff]
    %v65 = vld [vmem:[%s7 + $0x30] sm:$0xff]
    %v66 = vld [vmem:[%s7 + $0x38] sm:$0xff]
    %v67 = vld [vmem:[%s7 + $0x40] sm:$0xff]
    %v68 = vld [vmem:[%s7 + $0x48] sm:$0xff]
    %v69 = vld [vmem:[%s7 + $0x50] sm:$0xff]
    %v70 = vld [vmem:[%s7 + $0x58] sm:$0xff]
    %v71 = vld [vmem:[%s7 + $0x60] sm:$0xff]
    %v72 = vld [vmem:[%s7 + $0x68] sm:$0xff]
    %v73 = vld [vmem:[%s7 + $0x70] sm:$0xff]
    %v74 = vld [vmem:[%s7 + $0x78] sm:$0xff]
    %v75 = vld [vmem:[%s8] sm:$0xff]
    %v76 = vld [vmem:[%s4] sm:$0x3]
    %v77 = vld [vmem:[%s5] sm:$0x3]
    %v78 = vld [vmem:[%s6] sm:$0x3]
    %v79 = vmax.f32 %v47, 0.0
    %v80 = vmax.f32 %v48, 0.0
    %v81 = vmax.f32 %v49, 0.0
    %v82 = vmax.f32 %v50, 0.0
    %vm83 = vcmask 261120
    %v85 = vsel %vm83, %v51, 0
    %v88 = vsel %vm83, %v52, 0
    %v91 = vsel %vm83, %v53, 0
    %v94 = vsel %vm83, %v54, 0
    %96 = vmatprep.subr.mxu0 0.0
    %97 = vmatpush1.msra.mxu0 %v79
    %98 = vmatprep.subr.mxu0 0.0
    %99 = vmatpush1.msra.mxu0 %v80
    %100 = vmatprep.subr.mxu0 0.0
    %101 = vmatpush1.msra.mxu0 %v81
    %102 = vmatprep.subr.mxu0 0.0
    %103 = vmatpush1.msra.mxu0 %v82
    %104 = vmatprep.subr.mxu0 0.0
    %105 = vmatpush1.msra.mxu0 0.0
    %106 = vmatprep.subr.mxu0 0.0
    %107 = vmatpush1.msra.mxu0 0.0
    %108 = vmatprep.subr.mxu0 0.0
    %109 = vmatpush1.msra.mxu0 0.0
    %110 = vmatprep.subr.mxu0 0.0
    %111 = vmatpush1.msra.mxu0 0.0
    %112 = vmatprep.subr.mxu0 0.0
    %113 = vmatpush1.msra.mxu0 0.0
    %114 = vmatprep.subr.mxu0 0.0
    %115 = vmatpush1.msra.mxu0 0.0
    %116 = vmatprep.subr.mxu0 0.0
    %117 = vmatpush1.msra.mxu0 0.0
    %118 = vmatprep.subr.mxu0 0.0
    %119 = vmatpush1.msra.mxu0 0.0
    %120 = vmatprep.subr.mxu0 0.0
    %121 = vmatpush1.msra.mxu0 0.0
    %122 = vmatprep.subr.mxu0 0.0
    %123 = vmatpush1.msra.mxu0 0.0
    %124 = vmatprep.subr.mxu0 0.0
    %125 = vmatpush1.msra.mxu0 0.0
    %126 = vmatprep.subr.mxu0 0.0
    %127 = vmatpush1.msra.mxu0 0.0
    %128 = vmatprep.subr.mxu0 0.0
    %129 = vmatpush1.msra.mxu0 0.0
    %130 = vmatprep.subr.mxu0 0.0
    %131 = vmatpush1.msra.mxu0 0.0
    %132 = vmatprep.subr.mxu0 0.0
    %133 = vmatpush1.msra.mxu0 0.0
    %134 = vmatprep.subr.mxu0 0.0
    %135 = vmatpush1.msra.mxu0 0.0
    %136 = vmatprep.subr.mxu0 0.0
    %137 = vmatpush1.msra.mxu0 0.0
    %138 = vmatprep.subr.mxu0 0.0
    %139 = vmatpush1.msra.mxu0 0.0
    %140 = vmatprep.subr.mxu0 0.0
    %141 = vmatpush1.msra.mxu0 0.0
    %142 = vmatprep.subr.mxu0 0.0
    %143 = vmatpush1.msra.mxu0 0.0
    %144 = vmatprep.subr.mxu0 0.0
    %145 = vmatpush1.msra.mxu0 0.0
    %146 = vmatprep.subr.mxu0 0.0
    %147 = vmatpush1.msra.mxu0 0.0
    %148 = vmatprep.subr.mxu0 0.0
    %149 = vmatpush1.msra.mxu0 0.0
    %150 = vmatprep.subr.mxu0 0.0
    %151 = vmatpush1.msra.mxu0 0.0
    %152 = vmatprep.subr.mxu0 0.0
    %153 = vmatpush1.msra.mxu0 0.0
    %154 = vmatprep.subr.mxu0 0.0
    %155 = vmatpush1.msra.mxu0 0.0
    %156 = vmatprep.subr.mxu0 0.0
    %157 = vmatpush1.msra.mxu0 0.0
    %158 = vmatprep.subr.mxu0 0.0
    %159 = vmatpush1.msra.mxu0 0.0
    %160 = vmatprep.mubr.f32.mxu0 0.0
    %161 = vmatmul.mubr.f32.gmra.mrb[0].mxu0 %v85
    %v162 = vpop.f32.mrb[0].mxu0
    %v163 = vadd.f32 0.0, %v162
    %v164 = vpop.f32.mrb[0].mxu0
    %165 = vmatprep.mubr.f32.mxu0 0.0
    %166 = vmatmul.mubr.f32.gmra.mrb[0].mxu0 %v88
    %v167 = vpop.f32.mrb[0].mxu0
    %v168 = vadd.f32 0.0, %v167
    %v169 = vpop.f32.mrb[0].mxu0
    %170 = vmatprep.mubr.f32.mxu0 0.0
    %171 = vmatmul.mubr.f32.gmra.mrb[0].mxu0 %v91
    %v172 = vpop.f32.mrb[0].mxu0
    %v173 = vadd.f32 0.0, %v172
    %v174 = vpop.f32.mrb[0].mxu0
    %175 = vmatprep.mubr.f32.mxu0 0.0
    %176 = vmatmul.mubr.f32.gmra.mrb[0].mxu0 %v94
    %v177 = vpop.f32.mrb[0].mxu0
    %v178 = vadd.f32 0.0, %v177
    %v179 = vpop.f32.mrb[0].mxu0
    %180 = vdwg.mxu0
    %v182 = vsel %vm83, %v55, 0
    %v185 = vsel %vm83, %v56, 0
    %v188 = vsel %vm83, %v57, 0
    %v191 = vsel %vm83, %v58, 0
    %193 = vmatprep.subr.mxu0 0.0
    %194 = vmatpush1.msra.mxu0 %v79
    %195 = vmatprep.subr.mxu0 0.0
    %196 = vmatpush1.msra.mxu0 %v80
    %197 = vmatprep.subr.mxu0 0.0
    %198 = vmatpush1.msra.mxu0 %v81
    %199 = vmatprep.subr.mxu0 0.0
    %200 = vmatpush1.msra.mxu0 %v82
    %201 = vmatprep.subr.mxu0 0.0
    %202 = vmatpush1.msra.mxu0 0.0
    %203 = vmatprep.subr.mxu0 0.0
    %204 = vmatpush1.msra.mxu0 0.0
    %205 = vmatprep.subr.mxu0 0.0
    %206 = vmatpush1.msra.mxu0 0.0
    %207 = vmatprep.subr.mxu0 0.0
    %208 = vmatpush1.msra.mxu0 0.0
    %209 = vmatprep.subr.mxu0 0.0
    %210 = vmatpush1.msra.mxu0 0.0
    %211 = vmatprep.subr.mxu0 0.0
    %212 = vmatpush1.msra.mxu0 0.0
    %213 = vmatprep.subr.mxu0 0.0
    %214 = vmatpush1.msra.mxu0 0.0
    %215 = vmatprep.subr.mxu0 0.0
    %216 = vmatpush1.msra.mxu0 0.0
    %217 = vmatprep.subr.mxu0 0.0
    %218 = vmatpush1.msra.mxu0 0.0
    %219 = vmatprep.subr.mxu0 0.0
    %220 = vmatpush1.msra.mxu0 0.0
    %221 = vmatprep.subr.mxu0 0.0
    %222 = vmatpush1.msra.mxu0 0.0
    %223 = vmatprep.subr.mxu0 0.0
    %224 = vmatpush1.msra.mxu0 0.0
    %225 = vmatprep.subr.mxu0 0.0
    %226 = vmatpush1.msra.mxu0 0.0
    %227 = vmatprep.subr.mxu0 0.0
    %228 = vmatpush1.msra.mxu0 0.0
    %229 = vmatprep.subr.mxu0 0.0
    %230 = vmatpush1.msra.mxu0 0.0
    %231 = vmatprep.subr.mxu0 0.0
    %232 = vmatpush1.msra.mxu0 0.0
    %233 = vmatprep.subr.mxu0 0.0
    %234 = vmatpush1.msra.mxu0 0.0
    %235 = vmatprep.subr.mxu0 0.0
    %236 = vmatpush1.msra.mxu0 0.0
    %237 = vmatprep.subr.mxu0 0.0
    %238 = vmatpush1.msra.mxu0 0.0
    %239 = vmatprep.subr.mxu0 0.0
    %240 = vmatpush1.msra.mxu0 0.0
    %241 = vmatprep.subr.mxu0 0.0
    %242 = vmatpush1.msra.mxu0 0.0
    %243 = vmatprep.subr.mxu0 0.0
    %244 = vmatpush1.msra.mxu0 0.0
    %245 = vmatprep.subr.mxu0 0.0
    %246 = vmatpush1.msra.mxu0 0.0
    %247 = vmatprep.subr.mxu0 0.0
    %248 = vmatpush1.msra.mxu0 0.0
    %249 = vmatprep.subr.mxu0 0.0
    %250 = vmatpush1.msra.mxu0 0.0
    %251 = vmatprep.subr.mxu0 0.0
    %252 = vmatpush1.msra.mxu0 0.0
    %253 = vmatprep.subr.mxu0 0.0
    %254 = vmatpush1.msra.mxu0 0.0
    %255 = vmatprep.subr.mxu0 0.0
    %256 = vmatpush1.msra.mxu0 0.0
    %257 = vmatprep.mubr.f32.mxu0 0.0
    %258 = vmatmul.mubr.f32.gmra.mrb[0].mxu0 %v182
    %v259 = vpop.f32.mrb[0].mxu0
    %v260 = vadd.f32 0.0, %v259
    %v261 = vpop.f32.mrb[0].mxu0
    %262 = vmatprep.mubr.f32.mxu0 0.0
    %263 = vmatmul.mubr.f32.gmra.mrb[0].mxu0 %v185
    %v264 = vpop.f32.mrb[0].mxu0
    %v265 = vadd.f32 0.0, %v264
    %v266 = vpop.f32.mrb[0].mxu0
    %267 = vmatprep.mubr.f32.mxu0 0.0
    %268 = vmatmul.mubr.f32.gmra.mrb[0].mxu0 %v188
    %v269 = vpop.f32.mrb[0].mxu0
    %v270 = vadd.f32 0.0, %v269
    %v271 = vpop.f32.mrb[0].mxu0
    %272 = vmatprep.mubr.f32.mxu0 0.0
    %273 = vmatmul.mubr.f32.gmra.mrb[0].mxu0 %v191
    %v274 = vpop.f32.mrb[0].mxu0
    %v275 = vadd.f32 0.0, %v274
    %v276 = vpop.f32.mrb[0].mxu0
    %277 = vdwg.mxu0
    %v278 = vld [vmem:[#allocation2] sm:$0xff]
    %v279 = vld [vmem:[#allocation2 + $0x8] sm:$0xff]
    %v280 = vld [vmem:[#allocation2 + $0x10] sm:$0xff]
    %v281 = vld [vmem:[#allocation2 + $0x18] sm:$0xff]
    %v282 = vld [vmem:[#allocation2 + $0x20] sm:$0xff]
    %v283 = vld [vmem:[#allocation2 + $0x28] sm:$0xff]
    %v284 = vld [vmem:[#allocation2 + $0x30] sm:$0xff]
    %v285 = vld [vmem:[#allocation2 + $0x38] sm:$0xff]
    %v286 = vld [vmem:[#allocation2 + $0x40] sm:$0xff]
    %v287 = vld [vmem:[#allocation2 + $0x48] sm:$0xff]
    %v288 = vld [vmem:[#allocation2 + $0x50] sm:$0xff]
    %v289 = vld [vmem:[#allocation2 + $0x58] sm:$0xff]
    %v290 = vld [vmem:[#allocation2 + $0x60] sm:$0xff]
    %v291 = vld [vmem:[#allocation2 + $0x68] sm:$0xff]
    %v292 = vld [vmem:[#allocation2 + $0x70] sm:$0xff]
    %v293 = vld [vmem:[#allocation2 + $0x78] sm:$0xff]
    %v294 = vld [vmem:[#allocation2 + $0x80] sm:$0xff]
    %v295 = vld [vmem:[#allocation2 + $0x88] sm:$0xff]
    %v296 = vld [vmem:[#allocation2 + $0x90] sm:$0xff]
    %v297 = vld [vmem:[#allocation2 + $0x98] sm:$0xff]
    %v298 = vld [vmem:[#allocation2 + $0xa0] sm:$0xff]
    %v299 = vld [vmem:[#allocation2 + $0xa8] sm:$0xff]
    %v300 = vld [vmem:[#allocation2 + $0xb0] sm:$0xff]
    %v301 = vld [vmem:[#allocation2 + $0xb8] sm:$0xff]
    %v302 = vld [vmem:[#allocation2 + $0xc0] sm:$0xff]
    %v303 = vld [vmem:[#allocation2 + $0xc8] sm:$0xff]
    %v304 = vld [vmem:[#allocation2 + $0xd0] sm:$0xff]
    %v305 = vld [vmem:[#allocation2 + $0xd8] sm:$0xff]
    %v306 = vld [vmem:[#allocation2 + $0xe0] sm:$0xff]
    %v307 = vld [vmem:[#allocation2 + $0xe8] sm:$0xff]
    %v308 = vld [vmem:[#allocation2 + $0xf0] sm:$0xff]
    %v309 = vld [vmem:[#allocation2 + $0xf8] sm:$0xff]
    %v310 = vld [vmem:[#allocation2 + $0x100] sm:$0xff]
    %v311 = vld [vmem:[#allocation2 + $0x108] sm:$0xff]
    %v312 = vld [vmem:[#allocation2 + $0x110] sm:$0xff]
    %v313 = vld [vmem:[#allocation2 + $0x118] sm:$0xff]
    %v314 = vld [vmem:[#allocation2 + $0x120] sm:$0xff]
    %v315 = vld [vmem:[#allocation2 + $0x128] sm:$0xff]
    %v316 = vld [vmem:[#allocation2 + $0x130] sm:$0xff]
    %v317 = vld [vmem:[#allocation2 + $0x138] sm:$0xff]
    %v318 = vld [vmem:[#allocation2 + $0x140] sm:$0xff]
    %v319 = vld [vmem:[#allocation2 + $0x148] sm:$0xff]
    %v320 = vld [vmem:[#allocation2 + $0x150] sm:$0xff]
    %v321 = vld [vmem:[#allocation2 + $0x158] sm:$0xff]
    %v322 = vld [vmem:[#allocation2 + $0x160] sm:$0xff]
    %v323 = vld [vmem:[#allocation2 + $0x168] sm:$0xff]
    %v324 = vld [vmem:[#allocation2 + $0x170] sm:$0xff]
    %v325 = vld [vmem:[#allocation2 + $0x178] sm:$0xff]
    %v326 = vlaneseq
    %v327 = vshrl.u32 %v326, 7
    %v328 = vsub.s32 0, %v327
    %v329 = vrot.slane %v76, %v328
    %330 = vmatprep.subr.mxu0 0.0
    %331 = vmatpush1.msra.mxu0 %v278
    %332 = vmatprep.subr.mxu0 0.0
    %333 = vmatpush1.msra.mxu0 %v279
    %334 = vmatprep.subr.mxu0 0.0
    %335 = vmatpush1.msra.mxu0 %v280
    %336 = vmatprep.subr.mxu0 0.0
    %337 = vmatpush1.msra.mxu0 %v281
    %338 = vmatprep.subr.mxu0 0.0
    %339 = vmatpush1.msra.mxu0 %v282
    %340 = vmatprep.subr.mxu0 0.0
    %341 = vmatpush1.msra.mxu0 %v283
    %342 = vmatprep.subr.mxu0 0.0
    %343 = vmatpush1.msra.mxu0 %v284
    %344 = vmatprep.subr.mxu0 0.0
    %345 = vmatpush1.msra.mxu0 %v285
    %346 = vmatprep.subr.mxu0 0.0
    %347 = vmatpush1.msra.mxu0 %v286
    %348 = vmatprep.subr.mxu0 0.0
    %349 = vmatpush1.msra.mxu0 %v287
    %350 = vmatprep.subr.mxu0 0.0
    %351 = vmatpush1.msra.mxu0 %v288
    %352 = vmatprep.subr.mxu0 0.0
    %353 = vmatpush1.msra.mxu0 %v289
    %354 = vmatprep.subr.mxu0 0.0
    %355 = vmatpush1.msra.mxu0 %v290
    %356 = vmatprep.subr.mxu0 0.0
    %357 = vmatpush1.msra.mxu0 %v291
    %358 = vmatprep.subr.mxu0 0.0
    %359 = vmatpush1.msra.mxu0 %v292
    %360 = vmatprep.subr.mxu0 0.0
    %361 = vmatpush1.msra.mxu0 %v293
    %362 = vmatprep.subr.mxu0 0.0
    %363 = vmatpush1.msra.mxu0 %v294
    %364 = vmatprep.subr.mxu0 0.0
    %365 = vmatpush1.msra.mxu0 %v295
    %366 = vmatprep.subr.mxu0 0.0
    %367 = vmatpush1.msra.mxu0 %v296
    %368 = vmatprep.subr.mxu0 0.0
    %369 = vmatpush1.msra.mxu0 %v297
    %370 = vmatprep.subr.mxu0 0.0
    %371 = vmatpush1.msra.mxu0 %v298
    %372 = vmatprep.subr.mxu0 0.0
    %373 = vmatpush1.msra.mxu0 %v299
    %374 = vmatprep.subr.mxu0 0.0
    %375 = vmatpush1.msra.mxu0 %v300
    %376 = vmatprep.subr.mxu0 0.0
    %377 = vmatpush1.msra.mxu0 %v301
    %378 = vmatprep.subr.mxu0 0.0
    %379 = vmatpush1.msra.mxu0 %v302
    %380 = vmatprep.subr.mxu0 0.0
    %381 = vmatpush1.msra.mxu0 %v303
    %382 = vmatprep.subr.mxu0 0.0
    %383 = vmatpush1.msra.mxu0 %v304
    %384 = vmatprep.subr.mxu0 0.0
    %385 = vmatpush1.msra.mxu0 %v305
    %386 = vmatprep.subr.mxu0 0.0
    %387 = vmatpush1.msra.mxu0 %v306
    %388 = vmatprep.subr.mxu0 0.0
    %389 = vmatpush1.msra.mxu0 %v307
    %390 = vmatprep.subr.mxu0 0.0
    %391 = vmatpush1.msra.mxu0 %v308
    %392 = vmatprep.subr.mxu0 0.0
    %393 = vmatpush1.msra.mxu0 %v309
    %394 = vmatprep.mubr.f32.mxu0 %v79
    %395 = vmatmul.mubr.f32.gmra.mrb[0].mxu0 %v163
    %v396 = vpop.f32.mrb[0].mxu0
    %v397 = vadd.f32 %v329, %v396
    %v398 = vpop.f32.mrb[0].mxu0
    %399 = vmatprep.mubr.f32.mxu0 %v80
    %400 = vmatmul.mubr.f32.gmra.mrb[0].mxu0 %v168
    %v401 = vpop.f32.mrb[0].mxu0
    %v402 = vadd.f32 %v329, %v401
    %v403 = vpop.f32.mrb[0].mxu0
    %404 = vmatprep.mubr.f32.mxu0 %v81
    %405 = vmatmul.mubr.f32.gmra.mrb[0].mxu0 %v173
    %v406 = vpop.f32.mrb[0].mxu0
    %v407 = vadd.f32 %v329, %v406
    %v408 = vpop.f32.mrb[0].mxu0
    %409 = vmatprep.mubr.f32.mxu0 %v82
    %410 = vmatmul.mubr.f32.gmra.mrb[0].mxu0 %v178
    %v411 = vpop.f32.mrb[0].mxu0
    %v412 = vadd.f32 %v329, %v411
    %v413 = vpop.f32.mrb[0].mxu0
    %414 = vdwg.mxu0
    %415 = vmatprep.subr.mxu0 0.0
    %416 = vmatpush1.msra.mxu0 %v310
    %417 = vmatprep.subr.mxu0 0.0
    %418 = vmatpush1.msra.mxu0 %v311
    %419 = vmatprep.subr.mxu0 0.0
    %420 = vmatpush1.msra.mxu0 %v312
    %421 = vmatprep.subr.mxu0 0.0
    %422 = vmatpush1.msra.mxu0 %v313
    %423 = vmatprep.subr.mxu0 0.0
    %424 = vmatpush1.msra.mxu0 %v314
    %425 = vmatprep.subr.mxu0 0.0
    %426 = vmatpush1.msra.mxu0 %v315
    %427 = vmatprep.subr.mxu0 0.0
    %428 = vmatpush1.msra.mxu0 %v316
    %429 = vmatprep.subr.mxu0 0.0
    %430 = vmatpush1.msra.mxu0 %v317
    %431 = vmatprep.subr.mxu0 0.0
    %432 = vmatpush1.msra.mxu0 %v318
    %433 = vmatprep.subr.mxu0 0.0
    %434 = vmatpush1.msra.mxu0 %v319
    %435 = vmatprep.subr.mxu0 0.0
    %436 = vmatpush1.msra.mxu0 %v320
    %437 = vmatprep.subr.mxu0 0.0
    %438 = vmatpush1.msra.mxu0 %v321
    %439 = vmatprep.subr.mxu0 0.0
    %440 = vmatpush1.msra.mxu0 %v322
    %441 = vmatprep.subr.mxu0 0.0
    %442 = vmatpush1.msra.mxu0 %v323
    %443 = vmatprep.subr.mxu0 0.0
    %444 = vmatpush1.msra.mxu0 %v324
    %445 = vmatprep.subr.mxu0 0.0
    %446 = vmatpush1.msra.mxu0 %v325
    %447 = vmatprep.subr.mxu0 0.0
    %448 = vmatpush1.msra.mxu0 0.0
    %449 = vmatprep.subr.mxu0 0.0
    %450 = vmatpush1.msra.mxu0 0.0
    %451 = vmatprep.subr.mxu0 0.0
    %452 = vmatpush1.msra.mxu0 0.0
    %453 = vmatprep.subr.mxu0 0.0
    %454 = vmatpush1.msra.mxu0 0.0
    %455 = vmatprep.subr.mxu0 0.0
    %456 = vmatpush1.msra.mxu0 0.0
    %457 = vmatprep.subr.mxu0 0.0
    %458 = vmatpush1.msra.mxu0 0.0
    %459 = vmatprep.subr.mxu0 0.0
    %460 = vmatpush1.msra.mxu0 0.0
    %461 = vmatprep.subr.mxu0 0.0
    %462 = vmatpush1.msra.mxu0 0.0
    %463 = vmatprep.subr.mxu0 0.0
    %464 = vmatpush1.msra.mxu0 0.0
    %465 = vmatprep.subr.mxu0 0.0
    %466 = vmatpush1.msra.mxu0 0.0
    %467 = vmatprep.subr.mxu0 0.0
    %468 = vmatpush1.msra.mxu0 0.0
    %469 = vmatprep.subr.mxu0 0.0
    %470 = vmatpush1.msra.mxu0 0.0
    %471 = vmatprep.subr.mxu0 0.0
    %472 = vmatpush1.msra.mxu0 0.0
    %473 = vmatprep.subr.mxu0 0.0
    %474 = vmatpush1.msra.mxu0 0.0
    %475 = vmatprep.subr.mxu0 0.0
    %476 = vmatpush1.msra.mxu0 0.0
    %477 = vmatprep.subr.mxu0 0.0
    %478 = vmatpush1.msra.mxu0 0.0
    %479 = vmatprep.mubr.f32.mxu0 0.0
    %480 = vmatmul.mubr.f32.gmra.mrb[0].mxu0 %v260
    %v481 = vpop.f32.mrb[0].mxu0
    %v482 = vadd.f32 %v397, %v481
    %v483 = vpop.f32.mrb[0].mxu0
    %484 = vmatprep.mubr.f32.mxu0 0.0
    %485 = vmatmul.mubr.f32.gmra.mrb[0].mxu0 %v265
    %v486 = vpop.f32.mrb[0].mxu0
    %v487 = vadd.f32 %v402, %v486
    %v488 = vpop.f32.mrb[0].mxu0
    %489 = vmatprep.mubr.f32.mxu0 0.0
    %490 = vmatmul.mubr.f32.gmra.mrb[0].mxu0 %v270
    %v491 = vpop.f32.mrb[0].mxu0
    %v492 = vadd.f32 %v407, %v491
    %v493 = vpop.f32.mrb[0].mxu0
    %494 = vmatprep.mubr.f32.mxu0 0.0
    %495 = vmatmul.mubr.f32.gmra.mrb[0].mxu0 %v275
    %v496 = vpop.f32.mrb[0].mxu0
    %v497 = vadd.f32 %v412, %v496
    %v498 = vpop.f32.mrb[0].mxu0
    %499 = vdwg.mxu0
    %v500 = vadd.f32 %v482, %v487
    %v501 = vadd.f32 %v500, %v492
    %v502 = vadd.f32 %v501, %v497
    %v503 = vrot.slane %v502, 4
    %v504 = vadd.f32 %v502, %v503
    %v505 = vrot.slane %v504, 2
    %v506 = vadd.f32 %v504, %v505
    %v507 = vrot.slane %v506, 1
    %v508 = vadd.f32 %v506, %v507
    %509 = vmatprep.subr.mxu0 0.0
    %510 = vmatpush1.msra.mxu0 %v59
    %511 = vmatprep.subr.mxu0 0.0
    %512 = vmatpush1.msra.mxu0 %v60
    %513 = vmatprep.subr.mxu0 0.0
    %514 = vmatpush1.msra.mxu0 %v61
    %515 = vmatprep.subr.mxu0 0.0
    %516 = vmatpush1.msra.mxu0 %v62
    %517 = vmatprep.subr.mxu0 0.0
    %518 = vmatpush1.msra.mxu0 %v63
    %519 = vmatprep.subr.mxu0 0.0
    %520 = vmatpush1.msra.mxu0 %v64
    %521 = vmatprep.subr.mxu0 0.0
    %522 = vmatpush1.msra.mxu0 %v65
    %523 = vmatprep.subr.mxu0 0.0
    %524 = vmatpush1.msra.mxu0 %v66
    %525 = vmatprep.subr.mxu0 0.0
    %526 = vmatpush1.msra.mxu0 %v67
    %527 = vmatprep.subr.mxu0 0.0
    %528 = vmatpush1.msra.mxu0 %v68
    %529 = vmatprep.subr.mxu0 0.0
    %530 = vmatpush1.msra.mxu0 %v69
    %531 = vmatprep.subr.mxu0 0.0
    %532 = vmatpush1.msra.mxu0 %v70
    %533 = vmatprep.subr.mxu0 0.0
    %534 = vmatpush1.msra.mxu0 %v71
    %535 = vmatprep.subr.mxu0 0.0
    %536 = vmatpush1.msra.mxu0 %v72
    %537 = vmatprep.subr.mxu0 0.0
    %538 = vmatpush1.msra.mxu0 %v73
    %539 = vmatprep.subr.mxu0 0.0
    %540 = vmatpush1.msra.mxu0 %v74
    %541 = vmatprep.subr.mxu0 0.0
    %542 = vmatpush1.msra.mxu0 0.0
    %543 = vmatprep.subr.mxu0 0.0
    %544 = vmatpush1.msra.mxu0 0.0
    %545 = vmatprep.subr.mxu0 0.0
    %546 = vmatpush1.msra.mxu0 0.0
    %547 = vmatprep.subr.mxu0 0.0
    %548 = vmatpush1.msra.mxu0 0.0
    %549 = vmatprep.subr.mxu0 0.0
    %550 = vmatpush1.msra.mxu0 0.0
    %551 = vmatprep.subr.mxu0 0.0
    %552 = vmatpush1.msra.mxu0 0.0
    %553 = vmatprep.subr.mxu0 0.0
    %554 = vmatpush1.msra.mxu0 0.0
    %555 = vmatprep.subr.mxu0 0.0
    %556 = vmatpush1.msra.mxu0 0.0
    %557 = vmatprep.subr.mxu0 0.0
    %558 = vmatpush1.msra.mxu0 0.0
    %559 = vmatprep.subr.mxu0 0.0
    %560 = vmatpush1.msra.mxu0 0.0
    %561 = vmatprep.subr.mxu0 0.0
    %562 = vmatpush1.msra.mxu0 0.0
    %563 = vmatprep.subr.mxu0 0.0
    %564 = vmatpush1.msra.mxu0 0.0
    %565 = vmatprep.subr.mxu0 0.0
    %566 = vmatpush1.msra.mxu0 0.0
    %567 = vmatprep.subr.mxu0 0.0
    %568 = vmatpush1.msra.mxu0 0.0
    %569 = vmatprep.subr.mxu0 0.0
    %570 = vmatpush1.msra.mxu0 0.0
    %571 = vmatprep.subr.mxu0 0.0
    %572 = vmatpush1.msra.mxu0 0.0
    %573 = vmatprep.mubr.f32.mxu0 0.0
    %574 = vmatmul.mubr.f32.gmra.mrb[0].mxu0 %v508
    %v575 = vpop.f32.mrb[0].mxu0
    %v576 = vadd.f32 0.0, %v575
    %v577 = vpop.f32.mrb[0].mxu0
    %578 = vdwg.mxu0
    %v579 = vmul.f32 %v576, 0.001953125
    %vm580 = vcmask 64512
    %v582 = vsel %vm580, %v579, 0
    %584 = vmatprep.subr.mxu0 0.0
    %585 = vmatpush1.msra.mxu0 %v75
    %586 = vmatprep.subr.mxu0 0.0
    %587 = vmatpush1.msra.mxu0 0.0
    %588 = vmatprep.subr.mxu0 0.0
    %589 = vmatpush1.msra.mxu0 0.0
    %590 = vmatprep.subr.mxu0 0.0
    %591 = vmatpush1.msra.mxu0 0.0
    %592 = vmatprep.subr.mxu0 0.0
    %593 = vmatpush1.msra.mxu0 0.0
    %594 = vmatprep.subr.mxu0 0.0
    %595 = vmatpush1.msra.mxu0 0.0
    %596 = vmatprep.subr.mxu0 0.0
    %597 = vmatpush1.msra.mxu0 0.0
    %598 = vmatprep.subr.mxu0 0.0
    %599 = vmatpush1.msra.mxu0 0.0
    %600 = vmatprep.subr.mxu0 0.0
    %601 = vmatpush1.msra.mxu0 0.0
    %602 = vmatprep.subr.mxu0 0.0
    %603 = vmatpush1.msra.mxu0 0.0
    %604 = vmatprep.subr.mxu0 0.0
    %605 = vmatpush1.msra.mxu0 0.0
    %606 = vmatprep.subr.mxu0 0.0
    %607 = vmatpush1.msra.mxu0 0.0
    %608 = vmatprep.subr.mxu0 0.0
    %609 = vmatpush1.msra.mxu0 0.0
    %610 = vmatprep.subr.mxu0 0.0
    %611 = vmatpush1.msra.mxu0 0.0
    %612 = vmatprep.subr.mxu0 0.0
    %613 = vmatpush1.msra.mxu0 0.0
    %614 = vmatprep.subr.mxu0 0.0
    %615 = vmatpush1.msra.mxu0 0.0
    %616 = vmatprep.subr.mxu0 0.0
    %617 = vmatpush1.msra.mxu0 0.0
    %618 = vmatprep.subr.mxu0 0.0
    %619 = vmatpush1.msra.mxu0 0.0
    %620 = vmatprep.subr.mxu0 0.0
    %621 = vmatpush1.msra.mxu0 0.0
    %622 = vmatprep.subr.mxu0 0.0
    %623 = vmatpush1.msra.mxu0 0.0
    %624 = vmatprep.subr.mxu0 0.0
    %625 = vmatpush1.msra.mxu0 0.0
    %626 = vmatprep.subr.mxu0 0.0
    %627 = vmatpush1.msra.mxu0 0.0
    %628 = vmatprep.subr.mxu0 0.0
    %629 = vmatpush1.msra.mxu0 0.0
    %630 = vmatprep.subr.mxu0 0.0
    %631 = vmatpush1.msra.mxu0 0.0
    %632 = vmatprep.subr.mxu0 0.0
    %633 = vmatpush1.msra.mxu0 0.0
    %634 = vmatprep.subr.mxu0 0.0
    %635 = vmatpush1.msra.mxu0 0.0
    %636 = vmatprep.subr.mxu0 0.0
    %637 = vmatpush1.msra.mxu0 0.0
    %638 = vmatprep.subr.mxu0 0.0
    %639 = vmatpush1.msra.mxu0 0.0
    %640 = vmatprep.subr.mxu0 0.0
    %641 = vmatpush1.msra.mxu0 0.0
    %642 = vmatprep.subr.mxu0 0.0
    %643 = vmatpush1.msra.mxu0 0.0
    %644 = vmatprep.subr.mxu0 0.0
    %645 = vmatpush1.msra.mxu0 0.0
    %646 = vmatprep.subr.mxu0 0.0
    %647 = vmatpush1.msra.mxu0 0.0
    %648 = vmatprep.mubr.f32.mxu0 0.0
    %649 = vmatmul.mubr.f32.gmra.mrb[0].mxu0 %v582
    %v650 = vpop.f32.mrb[0].mxu0
    %v651 = vadd.f32 0.0, %v650
    %v652 = vpop.f32.mrb[0].mxu0
    %653 = vdwg.mxu0
    %v654 = vlaneseq
    %v655 = vshrl.u32 %v654, 7
    %v656 = vsub.s32 0, %v655
    %v657 = vrot.slane %v651, %v656
    %v658 = vsub.f32 %v482, %v657
    %v659 = vsub.f32 %v487, %v657
    %v660 = vsub.f32 %v492, %v657
    %v661 = vsub.f32 %v497, %v657
    %v662 = vmul.f32 %v658, %v658
    %v663 = vmul.f32 %v659, %v659
    %v664 = vmul.f32 %v660, %v660
    %v665 = vmul.f32 %v661, %v661
    %v666 = vadd.f32 %v662, %v663
    %v667 = vadd.f32 %v666, %v664
    %v668 = vadd.f32 %v667, %v665
    %v669 = vrot.slane %v668, 4
    %v670 = vadd.f32 %v668, %v669
    %v671 = vrot.slane %v670, 2
    %v672 = vadd.f32 %v670, %v671
    %v673 = vrot.slane %v672, 1
    %v674 = vadd.f32 %v672, %v673
    %675 = vmatprep.subr.mxu0 0.0
    %676 = vmatpush1.msra.mxu0 %v59
    %677 = vmatprep.subr.mxu0 0.0
    %678 = vmatpush1.msra.mxu0 %v60
    %679 = vmatprep.subr.mxu0 0.0
    %680 = vmatpush1.msra.mxu0 %v61
    %681 = vmatprep.subr.mxu0 0.0
    %682 = vmatpush1.msra.mxu0 %v62
    %683 = vmatprep.subr.mxu0 0.0
    %684 = vmatpush1.msra.mxu0 %v63
    %685 = vmatprep.subr.mxu0 0.0
    %686 = vmatpush1.msra.mxu0 %v64
    %687 = vmatprep.subr.mxu0 0.0
    %688 = vmatpush1.msra.mxu0 %v65
    %689 = vmatprep.subr.mxu0 0.0
    %690 = vmatpush1.msra.mxu0 %v66
    %691 = vmatprep.subr.mxu0 0.0
    %692 = vmatpush1.msra.mxu0 %v67
    %693 = vmatprep.subr.mxu0 0.0
    %694 = vmatpush1.msra.mxu0 %v68
    %695 = vmatprep.subr.mxu0 0.0
    %696 = vmatpush1.msra.mxu0 %v69
    %697 = vmatprep.subr.mxu0 0.0
    %698 = vmatpush1.msra.mxu0 %v70
    %699 = vmatprep.subr.mxu0 0.0
    %700 = vmatpush1.msra.mxu0 %v71
    %701 = vmatprep.subr.mxu0 0.0
    %702 = vmatpush1.msra.mxu0 %v72
    %703 = vmatprep.subr.mxu0 0.0
    %704 = vmatpush1.msra.mxu0 %v73
    %705 = vmatprep.subr.mxu0 0.0
    %706 = vmatpush1.msra.mxu0 %v74
    %707 = vmatprep.subr.mxu0 0.0
    %708 = vmatpush1.msra.mxu0 0.0
    %709 = vmatprep.subr.mxu0 0.0
    %710 = vmatpush1.msra.mxu0 0.0
    %711 = vmatprep.subr.mxu0 0.0
    %712 = vmatpush1.msra.mxu0 0.0
    %713 = vmatprep.subr.mxu0 0.0
    %714 = vmatpush1.msra.mxu0 0.0
    %715 = vmatprep.subr.mxu0 0.0
    %716 = vmatpush1.msra.mxu0 0.0
    %717 = vmatprep.subr.mxu0 0.0
    %718 = vmatpush1.msra.mxu0 0.0
    %719 = vmatprep.subr.mxu0 0.0
    %720 = vmatpush1.msra.mxu0 0.0
    %721 = vmatprep.subr.mxu0 0.0
    %722 = vmatpush1.msra.mxu0 0.0
    %723 = vmatprep.subr.mxu0 0.0
    %724 = vmatpush1.msra.mxu0 0.0
    %725 = vmatprep.subr.mxu0 0.0
    %726 = vmatpush1.msra.mxu0 0.0
    %727 = vmatprep.subr.mxu0 0.0
    %728 = vmatpush1.msra.mxu0 0.0
    %729 = vmatprep.subr.mxu0 0.0
    %730 = vmatpush1.msra.mxu0 0.0
    %731 = vmatprep.subr.mxu0 0.0
    %732 = vmatpush1.msra.mxu0 0.0
    %733 = vmatprep.subr.mxu0 0.0
    %734 = vmatpush1.msra.mxu0 0.0
    %735 = vmatprep.subr.mxu0 0.0
    %736 = vmatpush1.msra.mxu0 0.0
    %737 = vmatprep.subr.mxu0 0.0
    %738 = vmatpush1.msra.mxu0 0.0
    %739 = vmatprep.mubr.f32.mxu0 0.0
    %740 = vmatmul.mubr.f32.gmra.mrb[0].mxu0 %v674
    %v741 = vpop.f32.mrb[0].mxu0
    %v742 = vadd.f32 0.0, %v741
    %v743 = vpop.f32.mrb[0].mxu0
    %744 = vdwg.mxu0
    %v745 = vmul.f32 %v742, 0.001953125
    %v747 = vsel %vm580, %v745, 0
    %749 = vmatprep.subr.mxu0 0.0
    %750 = vmatpush1.msra.mxu0 %v75
    %751 = vmatprep.subr.mxu0 0.0
    %752 = vmatpush1.msra.mxu0 0.0
    %753 = vmatprep.subr.mxu0 0.0
    %754 = vmatpush1.msra.mxu0 0.0
    %755 = vmatprep.subr.mxu0 0.0
    %756 = vmatpush1.msra.mxu0 0.0
    %757 = vmatprep.subr.mxu0 0.0
    %758 = vmatpush1.msra.mxu0 0.0
    %759 = vmatprep.subr.mxu0 0.0
    %760 = vmatpush1.msra.mxu0 0.0
    %761 = vmatprep.subr.mxu0 0.0
    %762 = vmatpush1.msra.mxu0 0.0
    %763 = vmatprep.subr.mxu0 0.0
    %764 = vmatpush1.msra.mxu0 0.0
    %765 = vmatprep.subr.mxu0 0.0
    %766 = vmatpush1.msra.mxu0 0.0
    %767 = vmatprep.subr.mxu0 0.0
    %768 = vmatpush1.msra.mxu0 0.0
    %769 = vmatprep.subr.mxu0 0.0
    %770 = vmatpush1.msra.mxu0 0.0
    %771 = vmatprep.subr.mxu0 0.0
    %772 = vmatpush1.msra.mxu0 0.0
    %773 = vmatprep.subr.mxu0 0.0
    %774 = vmatpush1.msra.mxu0 0.0
    %775 = vmatprep.subr.mxu0 0.0
    %776 = vmatpush1.msra.mxu0 0.0
    %777 = vmatprep.subr.mxu0 0.0
    %778 = vmatpush1.msra.mxu0 0.0
    %779 = vmatprep.subr.mxu0 0.0
    %780 = vmatpush1.msra.mxu0 0.0
    %781 = vmatprep.subr.mxu0 0.0
    %782 = vmatpush1.msra.mxu0 0.0
    %783 = vmatprep.subr.mxu0 0.0
    %784 = vmatpush1.msra.mxu0 0.0
    %785 = vmatprep.subr.mxu0 0.0
    %786 = vmatpush1.msra.mxu0 0.0
    %787 = vmatprep.subr.mxu0 0.0
    %788 = vmatpush1.msra.mxu0 0.0
    %789 = vmatprep.subr.mxu0 0.0
    %790 = vmatpush1.msra.mxu0 0.0
    %791 = vmatprep.subr.mxu0 0.0
    %792 = vmatpush1.msra.mxu0 0.0
    %793 = vmatprep.subr.mxu0 0.0
    %794 = vmatpush1.msra.mxu0 0.0
    %795 = vmatprep.subr.mxu0 0.0
    %796 = vmatpush1.msra.mxu0 0.0
    %797 = vmatprep.subr.mxu0 0.0
    %798 = vmatpush1.msra.mxu0 0.0
    %799 = vmatprep.subr.mxu0 0.0
    %800 = vmatpush1.msra.mxu0 0.0
    %801 = vmatprep.subr.mxu0 0.0
    %802 = vmatpush1.msra.mxu0 0.0
    %803 = vmatprep.subr.mxu0 0.0
    %804 = vmatpush1.msra.mxu0 0.0
    %805 = vmatprep.subr.mxu0 0.0
    %806 = vmatpush1.msra.mxu0 0.0
    %807 = vmatprep.subr.mxu0 0.0
    %808 = vmatpush1.msra.mxu0 0.0
    %809 = vmatprep.subr.mxu0 0.0
    %810 = vmatpush1.msra.mxu0 0.0
    %811 = vmatprep.subr.mxu0 0.0
    %812 = vmatpush1.msra.mxu0 0.0
    %813 = vmatprep.mubr.f32.mxu0 0.0
    %814 = vmatmul.mubr.f32.gmra.mrb[0].mxu0 %v747
    %v815 = vpop.f32.mrb[0].mxu0
    %v816 = vadd.f32 1e-05, %v815
    %v817 = vpop.f32.mrb[0].mxu0
    %818 = vdwg.mxu0
    %v819 = vrsqrt.pop %v816
    %v820 = vmul.f32 %v819, %v77
    %v821 = vlaneseq
    %v822 = vshrl.u32 %v821, 7
    %v823 = vsub.s32 0, %v822
    %v824 = vrot.slane %v820, %v823
    %v825 = vmul.f32 %v658, %v824
    %v826 = vmul.f32 %v659, %v824
    %v827 = vmul.f32 %v660, %v824
    %v828 = vmul.f32 %v661, %v824
    %v829 = vlaneseq
    %v830 = vshrl.u32 %v829, 7
    %v831 = vsub.s32 0, %v830
    %v832 = vrot.slane %v78, %v831
    %v833 = vadd.f32 %v825, %v832
    %v834 = vadd.f32 %v826, %v832
    %v835 = vadd.f32 %v827, %v832
    %v836 = vadd.f32 %v828, %v832
    %v837 = vmax.f32 %v833, 0.0
    %v838 = vmax.f32 %v834, 0.0
    %v839 = vmax.f32 %v835, 0.0
    %v840 = vmax.f32 %v836, 0.0
    %841 = vmatprep.subr.mxu0 0.0
    %842 = vmatpush1.msra.mxu0 %v837
    %843 = vmatprep.subr.mxu0 0.0
    %844 = vmatpush1.msra.mxu0 %v838
    %845 = vmatprep.subr.mxu0 0.0
    %846 = vmatpush1.msra.mxu0 %v839
    %847 = vmatprep.subr.mxu0 0.0
    %848 = vmatpush1.msra.mxu0 %v840
    %849 = vmatprep.subr.mxu0 0.0
    %850 = vmatpush1.msra.mxu0 0.0
    %851 = vmatprep.subr.mxu0 0.0
    %852 = vmatpush1.msra.mxu0 0.0
    %853 = vmatprep.subr.mxu0 0.0
    %854 = vmatpush1.msra.mxu0 0.0
    %855 = vmatprep.subr.mxu0 0.0
    %856 = vmatpush1.msra.mxu0 0.0
    %857 = vmatprep.subr.mxu0 0.0
    %858 = vmatpush1.msra.mxu0 0.0
    %859 = vmatprep.subr.mxu0 0.0
    %860 = vmatpush1.msra.mxu0 0.0
    %861 = vmatprep.subr.mxu0 0.0
    %862 = vmatpush1.msra.mxu0 0.0
    %863 = vmatprep.subr.mxu0 0.0
    %864 = vmatpush1.msra.mxu0 0.0
    %865 = vmatprep.subr.mxu0 0.0
    %866 = vmatpush1.msra.mxu0 0.0
    %867 = vmatprep.subr.mxu0 0.0
    %868 = vmatpush1.msra.mxu0 0.0
    %869 = vmatprep.subr.mxu0 0.0
    %870 = vmatpush1.msra.mxu0 0.0
    %871 = vmatprep.subr.mxu0 0.0
    %872 = vmatpush1.msra.mxu0 0.0
    %873 = vmatprep.subr.mxu0 0.0
    %874 = vmatpush1.msra.mxu0 0.0
    %875 = vmatprep.subr.mxu0 0.0
    %876 = vmatpush1.msra.mxu0 0.0
    %877 = vmatprep.subr.mxu0 0.0
    %878 = vmatpush1.msra.mxu0 0.0
    %879 = vmatprep.subr.mxu0 0.0
    %880 = vmatpush1.msra.mxu0 0.0
    %881 = vmatprep.subr.mxu0 0.0
    %882 = vmatpush1.msra.mxu0 0.0
    %883 = vmatprep.subr.mxu0 0.0
    %884 = vmatpush1.msra.mxu0 0.0
    %885 = vmatprep.subr.mxu0 0.0
    %886 = vmatpush1.msra.mxu0 0.0
    %887 = vmatprep.subr.mxu0 0.0
    %888 = vmatpush1.msra.mxu0 0.0
    %889 = vmatprep.subr.mxu0 0.0
    %890 = vmatpush1.msra.mxu0 0.0
    %891 = vmatprep.subr.mxu0 0.0
    %892 = vmatpush1.msra.mxu0 0.0
    %893 = vmatprep.subr.mxu0 0.0
    %894 = vmatpush1.msra.mxu0 0.0
    %895 = vmatprep.subr.mxu0 0.0
    %896 = vmatpush1.msra.mxu0 0.0
    %897 = vmatprep.subr.mxu0 0.0
    %898 = vmatpush1.msra.mxu0 0.0
    %899 = vmatprep.subr.mxu0 0.0
    %900 = vmatpush1.msra.mxu0 0.0
    %901 = vmatprep.subr.mxu0 0.0
    %902 = vmatpush1.msra.mxu0 0.0
    %903 = vmatprep.subr.mxu0 0.0
    %904 = vmatpush1.msra.mxu0 0.0
    %905 = vmatprep.mubr.f32.mxu0 0.0
    %906 = vmatmul.mubr.f32.gmra.mrb[0].mxu0 %v85
    %v907 = vpop.f32.mrb[0].mxu0
    %v908 = vadd.f32 0.0, %v907
    %v909 = vpop.f32.mrb[0].mxu0
    %910 = vmatprep.mubr.f32.mxu0 0.0
    %911 = vmatmul.mubr.f32.gmra.mrb[0].mxu0 %v88
    %v912 = vpop.f32.mrb[0].mxu0
    %v913 = vadd.f32 0.0, %v912
    %v914 = vpop.f32.mrb[0].mxu0
    %915 = vmatprep.mubr.f32.mxu0 0.0
    %916 = vmatmul.mubr.f32.gmra.mrb[0].mxu0 %v91
    %v917 = vpop.f32.mrb[0].mxu0
    %v918 = vadd.f32 0.0, %v917
    %v919 = vpop.f32.mrb[0].mxu0
    %920 = vmatprep.mubr.f32.mxu0 0.0
    %921 = vmatmul.mubr.f32.gmra.mrb[0].mxu0 %v94
    %v922 = vpop.f32.mrb[0].mxu0
    %v923 = vadd.f32 0.0, %v922
    %v924 = vpop.f32.mrb[0].mxu0
    %925 = vdwg.mxu0
    %926 = vmatprep.subr.mxu0 0.0
    %927 = vmatpush1.msra.mxu0 %v837
    %928 = vmatprep.subr.mxu0 0.0
    %929 = vmatpush1.msra.mxu0 %v838
    %930 = vmatprep.subr.mxu0 0.0
    %931 = vmatpush1.msra.mxu0 %v839
    %932 = vmatprep.subr.mxu0 0.0
    %933 = vmatpush1.msra.mxu0 %v840
    %934 = vmatprep.subr.mxu0 0.0
    %935 = vmatpush1.msra.mxu0 0.0
    %936 = vmatprep.subr.mxu0 0.0
    %937 = vmatpush1.msra.mxu0 0.0
    %938 = vmatprep.subr.mxu0 0.0
    %939 = vmatpush1.msra.mxu0 0.0
    %940 = vmatprep.subr.mxu0 0.0
    %941 = vmatpush1.msra.mxu0 0.0
    %942 = vmatprep.subr.mxu0 0.0
    %943 = vmatpush1.msra.mxu0 0.0
    %944 = vmatprep.subr.mxu0 0.0
    %945 = vmatpush1.msra.mxu0 0.0
    %946 = vmatprep.subr.mxu0 0.0
    %947 = vmatpush1.msra.mxu0 0.0
    %948 = vmatprep.subr.mxu0 0.0
    %949 = vmatpush1.msra.mxu0 0.0
    %950 = vmatprep.subr.mxu0 0.0
    %951 = vmatpush1.msra.mxu0 0.0
    %952 = vmatprep.subr.mxu0 0.0
    %953 = vmatpush1.msra.mxu0 0.0
    %954 = vmatprep.subr.mxu0 0.0
    %955 = vmatpush1.msra.mxu0 0.0
    %956 = vmatprep.subr.mxu0 0.0
    %957 = vmatpush1.msra.mxu0 0.0
    %958 = vmatprep.subr.mxu0 0.0
    %959 = vmatpush1.msra.mxu0 0.0
    %960 = vmatprep.subr.mxu0 0.0
    %961 = vmatpush1.msra.mxu0 0.0
    %962 = vmatprep.subr.mxu0 0.0
    %963 = vmatpush1.msra.mxu0 0.0
    %964 = vmatprep.subr.mxu0 0.0
    %965 = vmatpush1.msra.mxu0 0.0
    %966 = vmatprep.subr.mxu0 0.0
    %967 = vmatpush1.msra.mxu0 0.0
    %968 = vmatprep.subr.mxu0 0.0
    %969 = vmatpush1.msra.mxu0 0.0
    %970 = vmatprep.subr.mxu0 0.0
    %971 = vmatpush1.msra.mxu0 0.0
    %972 = vmatprep.subr.mxu0 0.0
    %973 = vmatpush1.msra.mxu0 0.0
    %974 = vmatprep.subr.mxu0 0.0
    %975 = vmatpush1.msra.mxu0 0.0
    %976 = vmatprep.subr.mxu0 0.0
    %977 = vmatpush1.msra.mxu0 0.0
    %978 = vmatprep.subr.mxu0 0.0
    %979 = vmatpush1.msra.mxu0 0.0
    %980 = vmatprep.subr.mxu0 0.0
    %981 = vmatpush1.msra.mxu0 0.0
    %982 = vmatprep.subr.mxu0 0.0
    %983 = vmatpush1.msra.mxu0 0.0
    %984 = vmatprep.subr.mxu0 0.0
    %985 = vmatpush1.msra.mxu0 0.0
    %986 = vmatprep.subr.mxu0 0.0
    %987 = vmatpush1.msra.mxu0 0.0
    %988 = vmatprep.subr.mxu0 0.0
    %989 = vmatpush1.msra.mxu0 0.0
    %990 = vmatprep.mubr.f32.mxu0 0.0
    %991 = vmatmul.mubr.f32.gmra.mrb[0].mxu0 %v182
    %v992 = vpop.f32.mrb[0].mxu0
    %v993 = vadd.f32 0.0, %v992
    %v994 = vpop.f32.mrb[0].mxu0
    %995 = vmatprep.mubr.f32.mxu0 0.0
    %996 = vmatmul.mubr.f32.gmra.mrb[0].mxu0 %v185
    %v997 = vpop.f32.mrb[0].mxu0
    %v998 = vadd.f32 0.0, %v997
    %v999 = vpop.f32.mrb[0].mxu0
    %1000 = vmatprep.mubr.f32.mxu0 0.0
    %1001 = vmatmul.mubr.f32.gmra.mrb[0].mxu0 %v188
    %v1002 = vpop.f32.mrb[0].mxu0
    %v1003 = vadd.f32 0.0, %v1002
    %v1004 = vpop.f32.mrb[0].mxu0
    %1005 = vmatprep.mubr.f32.mxu0 0.0
    %1006 = vmatmul.mubr.f32.gmra.mrb[0].mxu0 %v191
    %v1007 = vpop.f32.mrb[0].mxu0
    %v1008 = vadd.f32 0.0, %v1007
    %v1009 = vpop.f32.mrb[0].mxu0
    %1010 = vdwg.mxu0
    %s1011 = scalar_lea.vmem [#allocation2], 384
    %v1012 = vld [vmem:[%s1011] sm:$0xff]
    %v1013 = vld [vmem:[%s1011 + $0x8] sm:$0xff]
    %v1014 = vld [vmem:[%s1011 + $0x10] sm:$0xff]
    %v1015 = vld [vmem:[%s1011 + $0x18] sm:$0xff]
    %v1016 = vld [vmem:[%s1011 + $0x20] sm:$0xff]
    %v1017 = vld [vmem:[%s1011 + $0x28] sm:$0xff]
    %v1018 = vld [vmem:[%s1011 + $0x30] sm:$0xff]
    %v1019 = vld [vmem:[%s1011 + $0x38] sm:$0xff]
    %v1020 = vld [vmem:[%s1011 + $0x40] sm:$0xff]
    %v1021 = vld [vmem:[%s1011 + $0x48] sm:$0xff]
    %v1022 = vld [vmem:[%s1011 + $0x50] sm:$0xff]
    %v1023 = vld [vmem:[%s1011 + $0x58] sm:$0xff]
    %v1024 = vld [vmem:[%s1011 + $0x60] sm:$0xff]
    %v1025 = vld [vmem:[%s1011 + $0x68] sm:$0xff]
    %v1026 = vld [vmem:[%s1011 + $0x70] sm:$0xff]
    %v1027 = vld [vmem:[%s1011 + $0x78] sm:$0xff]
    %v1028 = vld [vmem:[%s1011 + $0x80] sm:$0xff]
    %v1029 = vld [vmem:[%s1011 + $0x88] sm:$0xff]
    %v1030 = vld [vmem:[%s1011 + $0x90] sm:$0xff]
    %v1031 = vld [vmem:[%s1011 + $0x98] sm:$0xff]
    %v1032 = vld [vmem:[%s1011 + $0xa0] sm:$0xff]
    %v1033 = vld [vmem:[%s1011 + $0xa8] sm:$0xff]
    %v1034 = vld [vmem:[%s1011 + $0xb0] sm:$0xff]
    %v1035 = vld [vmem:[%s1011 + $0xb8] sm:$0xff]
    %v1036 = vld [vmem:[%s1011 + $0xc0] sm:$0xff]
    %v1037 = vld [vmem:[%s1011 + $0xc8] sm:$0xff]
    %v1038 = vld [vmem:[%s1011 + $0xd0] sm:$0xff]
    %v1039 = vld [vmem:[%s1011 + $0xd8] sm:$0xff]
    %v1040 = vld [vmem:[%s1011 + $0xe0] sm:$0xff]
    %v1041 = vld [vmem:[%s1011 + $0xe8] sm:$0xff]
    %v1042 = vld [vmem:[%s1011 + $0xf0] sm:$0xff]
    %v1043 = vld [vmem:[%s1011 + $0xf8] sm:$0xff]
    %v1044 = vld [vmem:[%s1011 + $0x100] sm:$0xff]
    %v1045 = vld [vmem:[%s1011 + $0x108] sm:$0xff]
    %v1046 = vld [vmem:[%s1011 + $0x110] sm:$0xff]
    %v1047 = vld [vmem:[%s1011 + $0x118] sm:$0xff]
    %v1048 = vld [vmem:[%s1011 + $0x120] sm:$0xff]
    %v1049 = vld [vmem:[%s1011 + $0x128] sm:$0xff]
    %v1050 = vld [vmem:[%s1011 + $0x130] sm:$0xff]
    %v1051 = vld [vmem:[%s1011 + $0x138] sm:$0xff]
    %v1052 = vld [vmem:[%s1011 + $0x140] sm:$0xff]
    %v1053 = vld [vmem:[%s1011 + $0x148] sm:$0xff]
    %v1054 = vld [vmem:[%s1011 + $0x150] sm:$0xff]
    %v1055 = vld [vmem:[%s1011 + $0x158] sm:$0xff]
    %v1056 = vld [vmem:[%s1011 + $0x160] sm:$0xff]
    %v1057 = vld [vmem:[%s1011 + $0x168] sm:$0xff]
    %v1058 = vld [vmem:[%s1011 + $0x170] sm:$0xff]
    %v1059 = vld [vmem:[%s1011 + $0x178] sm:$0xff]
    %v1060 = vlaneseq
    %v1061 = vshrl.u32 %v1060, 7
    %v1062 = vsub.s32 1, %v1061
    %v1063 = vrot.slane %v76, %v1062
    %1064 = vmatprep.subr.mxu0 0.0
    %1065 = vmatpush1.msra.mxu0 %v1012
    %1066 = vmatprep.subr.mxu0 0.0
    %1067 = vmatpush1.msra.mxu0 %v1013
    %1068 = vmatprep.subr.mxu0 0.0
    %1069 = vmatpush1.msra.mxu0 %v1014
    %1070 = vmatprep.subr.mxu0 0.0
    %1071 = vmatpush1.msra.mxu0 %v1015
    %1072 = vmatprep.subr.mxu0 0.0
    %1073 = vmatpush1.msra.mxu0 %v1016
    %1074 = vmatprep.subr.mxu0 0.0
    %1075 = vmatpush1.msra.mxu0 %v1017
    %1076 = vmatprep.subr.mxu0 0.0
    %1077 = vmatpush1.msra.mxu0 %v1018
    %1078 = vmatprep.subr.mxu0 0.0
    %1079 = vmatpush1.msra.mxu0 %v1019
    %1080 = vmatprep.subr.mxu0 0.0
    %1081 = vmatpush1.msra.mxu0 %v1020
    %1082 = vmatprep.subr.mxu0 0.0
    %1083 = vmatpush1.msra.mxu0 %v1021
    %1084 = vmatprep.subr.mxu0 0.0
    %1085 = vmatpush1.msra.mxu0 %v1022
    %1086 = vmatprep.subr.mxu0 0.0
    %1087 = vmatpush1.msra.mxu0 %v1023
    %1088 = vmatprep.subr.mxu0 0.0
    %1089 = vmatpush1.msra.mxu0 %v1024
    %1090 = vmatprep.subr.mxu0 0.0
    %1091 = vmatpush1.msra.mxu0 %v1025
    %1092 = vmatprep.subr.mxu0 0.0
    %1093 = vmatpush1.msra.mxu0 %v1026
    %1094 = vmatprep.subr.mxu0 0.0
    %1095 = vmatpush1.msra.mxu0 %v1027
    %1096 = vmatprep.subr.mxu0 0.0
    %1097 = vmatpush1.msra.mxu0 %v1028
    %1098 = vmatprep.subr.mxu0 0.0
    %1099 = vmatpush1.msra.mxu0 %v1029
    %1100 = vmatprep.subr.mxu0 0.0
    %1101 = vmatpush1.msra.mxu0 %v1030
    %1102 = vmatprep.subr.mxu0 0.0
    %1103 = vmatpush1.msra.mxu0 %v1031
    %1104 = vmatprep.subr.mxu0 0.0
    %1105 = vmatpush1.msra.mxu0 %v1032
    %1106 = vmatprep.subr.mxu0 0.0
    %1107 = vmatpush1.msra.mxu0 %v1033
    %1108 = vmatprep.subr.mxu0 0.0
    %1109 = vmatpush1.msra.mxu0 %v1034
    %1110 = vmatprep.subr.mxu0 0.0
    %1111 = vmatpush1.msra.mxu0 %v1035
    %1112 = vmatprep.subr.mxu0 0.0
    %1113 = vmatpush1.msra.mxu0 %v1036
    %1114 = vmatprep.subr.mxu0 0.0
    %1115 = vmatpush1.msra.mxu0 %v1037
    %1116 = vmatprep.subr.mxu0 0.0
    %1117 = vmatpush1.msra.mxu0 %v1038
    %1118 = vmatprep.subr.mxu0 0.0
    %1119 = vmatpush1.msra.mxu0 %v1039
    %1120 = vmatprep.subr.mxu0 0.0
    %1121 = vmatpush1.msra.mxu0 %v1040
    %1122 = vmatprep.subr.mxu0 0.0
    %1123 = vmatpush1.msra.mxu0 %v1041
    %1124 = vmatprep.subr.mxu0 0.0
    %1125 = vmatpush1.msra.mxu0 %v1042
    %1126 = vmatprep.subr.mxu0 0.0
    %1127 = vmatpush1.msra.mxu0 %v1043
    %1128 = vmatprep.mubr.f32.mxu0 %v837
    %1129 = vmatmul.mubr.f32.gmra.mrb[0].mxu0 %v908
    %v1130 = vpop.f32.mrb[0].mxu0
    %v1131 = vadd.f32 %v1063, %v1130
    %v1132 = vpop.f32.mrb[0].mxu0
    %1133 = vmatprep.mubr.f32.mxu0 %v838
    %1134 = vmatmul.mubr.f32.gmra.mrb[0].mxu0 %v913
    %v1135 = vpop.f32.mrb[0].mxu0
    %v1136 = vadd.f32 %v1063, %v1135
    %v1137 = vpop.f32.mrb[0].mxu0
    %1138 = vmatprep.mubr.f32.mxu0 %v839
    %1139 = vmatmul.mubr.f32.gmra.mrb[0].mxu0 %v918
    %v1140 = vpop.f32.mrb[0].mxu0
    %v1141 = vadd.f32 %v1063, %v1140
    %v1142 = vpop.f32.mrb[0].mxu0
    %1143 = vmatprep.mubr.f32.mxu0 %v840
    %1144 = vmatmul.mubr.f32.gmra.mrb[0].mxu0 %v923
    %v1145 = vpop.f32.mrb[0].mxu0
    %v1146 = vadd.f32 %v1063, %v1145
    %v1147 = vpop.f32.mrb[0].mxu0
    %1148 = vdwg.mxu0
    %1149 = vmatprep.subr.mxu0 0.0
    %1150 = vmatpush1.msra.mxu0 %v1044
    %1151 = vmatprep.subr.mxu0 0.0
    %1152 = vmatpush1.msra.mxu0 %v1045
    %1153 = vmatprep.subr.mxu0 0.0
    %1154 = vmatpush1.msra.mxu0 %v1046
    %1155 = vmatprep.subr.mxu0 0.0
    %1156 = vmatpush1.msra.mxu0 %v1047
    %1157 = vmatprep.subr.mxu0 0.0
    %1158 = vmatpush1.msra.mxu0 %v1048
    %1159 = vmatprep.subr.mxu0 0.0
    %1160 = vmatpush1.msra.mxu0 %v1049
    %1161 = vmatprep.subr.mxu0 0.0
    %1162 = vmatpush1.msra.mxu0 %v1050
    %1163 = vmatprep.subr.mxu0 0.0
    %1164 = vmatpush1.msra.mxu0 %v1051
    %1165 = vmatprep.subr.mxu0 0.0
    %1166 = vmatpush1.msra.mxu0 %v1052
    %1167 = vmatprep.subr.mxu0 0.0
    %1168 = vmatpush1.msra.mxu0 %v1053
    %1169 = vmatprep.subr.mxu0 0.0
    %1170 = vmatpush1.msra.mxu0 %v1054
    %1171 = vmatprep.subr.mxu0 0.0
    %1172 = vmatpush1.msra.mxu0 %v1055
    %1173 = vmatprep.subr.mxu0 0.0
    %1174 = vmatpush1.msra.mxu0 %v1056
    %1175 = vmatprep.subr.mxu0 0.0
    %1176 = vmatpush1.msra.mxu0 %v1057
    %1177 = vmatprep.subr.mxu0 0.0
    %1178 = vmatpush1.msra.mxu0 %v1058
    %1179 = vmatprep.subr.mxu0 0.0
    %1180 = vmatpush1.msra.mxu0 %v1059
    %1181 = vmatprep.subr.mxu0 0.0
    %1182 = vmatpush1.msra.mxu0 0.0
    %1183 = vmatprep.subr.mxu0 0.0
    %1184 = vmatpush1.msra.mxu0 0.0
    %1185 = vmatprep.subr.mxu0 0.0
    %1186 = vmatpush1.msra.mxu0 0.0
    %1187 = vmatprep.subr.mxu0 0.0
    %1188 = vmatpush1.msra.mxu0 0.0
    %1189 = vmatprep.subr.mxu0 0.0
    %1190 = vmatpush1.msra.mxu0 0.0
    %1191 = vmatprep.subr.mxu0 0.0
    %1192 = vmatpush1.msra.mxu0 0.0
    %1193 = vmatprep.subr.mxu0 0.0
    %1194 = vmatpush1.msra.mxu0 0.0
    %1195 = vmatprep.subr.mxu0 0.0
    %1196 = vmatpush1.msra.mxu0 0.0
    %1197 = vmatprep.subr.mxu0 0.0
    %1198 = vmatpush1.msra.mxu0 0.0
    %1199 = vmatprep.subr.mxu0 0.0
    %1200 = vmatpush1.msra.mxu0 0.0
    %1201 = vmatprep.subr.mxu0 0.0
    %1202 = vmatpush1.msra.mxu0 0.0
    %1203 = vmatprep.subr.mxu0 0.0
    %1204 = vmatpush1.msra.mxu0 0.0
    %1205 = vmatprep.subr.mxu0 0.0
    %1206 = vmatpush1.msra.mxu0 0.0
    %1207 = vmatprep.subr.mxu0 0.0
    %1208 = vmatpush1.msra.mxu0 0.0
    %1209 = vmatprep.subr.mxu0 0.0
    %1210 = vmatpush1.msra.mxu0 0.0
    %1211 = vmatprep.subr.mxu0 0.0
    %1212 = vmatpush1.msra.mxu0 0.0
    %1213 = vmatprep.mubr.f32.mxu0 0.0
    %1214 = vmatmul.mubr.f32.gmra.mrb[0].mxu0 %v993
    %v1215 = vpop.f32.mrb[0].mxu0
    %v1216 = vadd.f32 %v1131, %v1215
    %v1217 = vpop.f32.mrb[0].mxu0
    %1218 = vmatprep.mubr.f32.mxu0 0.0
    %1219 = vmatmul.mubr.f32.gmra.mrb[0].mxu0 %v998
    %v1220 = vpop.f32.mrb[0].mxu0
    %v1221 = vadd.f32 %v1136, %v1220
    %v1222 = vpop.f32.mrb[0].mxu0
    %1223 = vmatprep.mubr.f32.mxu0 0.0
    %1224 = vmatmul.mubr.f32.gmra.mrb[0].mxu0 %v1003
    %v1225 = vpop.f32.mrb[0].mxu0
    %v1226 = vadd.f32 %v1141, %v1225
    %v1227 = vpop.f32.mrb[0].mxu0
    %1228 = vmatprep.mubr.f32.mxu0 0.0
    %1229 = vmatmul.mubr.f32.gmra.mrb[0].mxu0 %v1008
    %v1230 = vpop.f32.mrb[0].mxu0
    %v1231 = vadd.f32 %v1146, %v1230
    %v1232 = vpop.f32.mrb[0].mxu0
    %1233 = vdwg.mxu0
    %v1234 = vadd.f32 %v1216, %v1221
    %v1235 = vadd.f32 %v1234, %v1226
    %v1236 = vadd.f32 %v1235, %v1231
    %v1237 = vrot.slane %v1236, 4
    %v1238 = vadd.f32 %v1236, %v1237
    %v1239 = vrot.slane %v1238, 2
    %v1240 = vadd.f32 %v1238, %v1239
    %v1241 = vrot.slane %v1240, 1
    %v1242 = vadd.f32 %v1240, %v1241
    %1243 = vmatprep.subr.mxu0 0.0
    %1244 = vmatpush1.msra.mxu0 %v59
    %1245 = vmatprep.subr.mxu0 0.0
    %1246 = vmatpush1.msra.mxu0 %v60
    %1247 = vmatprep.subr.mxu0 0.0
    %1248 = vmatpush1.msra.mxu0 %v61
    %1249 = vmatprep.subr.mxu0 0.0
    %1250 = vmatpush1.msra.mxu0 %v62
    %1251 = vmatprep.subr.mxu0 0.0
    %1252 = vmatpush1.msra.mxu0 %v63
    %1253 = vmatprep.subr.mxu0 0.0
    %1254 = vmatpush1.msra.mxu0 %v64
    %1255 = vmatprep.subr.mxu0 0.0
    %1256 = vmatpush1.msra.mxu0 %v65
    %1257 = vmatprep.subr.mxu0 0.0
    %1258 = vmatpush1.msra.mxu0 %v66
    %1259 = vmatprep.subr.mxu0 0.0
    %1260 = vmatpush1.msra.mxu0 %v67
    %1261 = vmatprep.subr.mxu0 0.0
    %1262 = vmatpush1.msra.mxu0 %v68
    %1263 = vmatprep.subr.mxu0 0.0
    %1264 = vmatpush1.msra.mxu0 %v69
    %1265 = vmatprep.subr.mxu0 0.0
    %1266 = vmatpush1.msra.mxu0 %v70
    %1267 = vmatprep.subr.mxu0 0.0
    %1268 = vmatpush1.msra.mxu0 %v71
    %1269 = vmatprep.subr.mxu0 0.0
    %1270 = vmatpush1.msra.mxu0 %v72
    %1271 = vmatprep.subr.mxu0 0.0
    %1272 = vmatpush1.msra.mxu0 %v73
    %1273 = vmatprep.subr.mxu0 0.0
    %1274 = vmatpush1.msra.mxu0 %v74
    %1275 = vmatprep.subr.mxu0 0.0
    %1276 = vmatpush1.msra.mxu0 0.0
    %1277 = vmatprep.subr.mxu0 0.0
    %1278 = vmatpush1.msra.mxu0 0.0
    %1279 = vmatprep.subr.mxu0 0.0
    %1280 = vmatpush1.msra.mxu0 0.0
    %1281 = vmatprep.subr.mxu0 0.0
    %1282 = vmatpush1.msra.mxu0 0.0
    %1283 = vmatprep.subr.mxu0 0.0
    %1284 = vmatpush1.msra.mxu0 0.0
    %1285 = vmatprep.subr.mxu0 0.0
    %1286 = vmatpush1.msra.mxu0 0.0
    %1287 = vmatprep.subr.mxu0 0.0
    %1288 = vmatpush1.msra.mxu0 0.0
    %1289 = vmatprep.subr.mxu0 0.0
    %1290 = vmatpush1.msra.mxu0 0.0
    %1291 = vmatprep.subr.mxu0 0.0
    %1292 = vmatpush1.msra.mxu0 0.0
    %1293 = vmatprep.subr.mxu0 0.0
    %1294 = vmatpush1.msra.mxu0 0.0
    %1295 = vmatprep.subr.mxu0 0.0
    %1296 = vmatpush1.msra.mxu0 0.0
    %1297 = vmatprep.subr.mxu0 0.0
    %1298 = vmatpush1.msra.mxu0 0.0
    %1299 = vmatprep.subr.mxu0 0.0
    %1300 = vmatpush1.msra.mxu0 0.0
    %1301 = vmatprep.subr.mxu0 0.0
    %1302 = vmatpush1.msra.mxu0 0.0
    %1303 = vmatprep.subr.mxu0 0.0
    %1304 = vmatpush1.msra.mxu0 0.0
    %1305 = vmatprep.subr.mxu0 0.0
    %1306 = vmatpush1.msra.mxu0 0.0
    %1307 = vmatprep.mubr.f32.mxu0 0.0
    %1308 = vmatmul.mubr.f32.gmra.mrb[0].mxu0 %v1242
    %v1309 = vpop.f32.mrb[0].mxu0
    %v1310 = vadd.f32 0.0, %v1309
    %v1311 = vpop.f32.mrb[0].mxu0
    %1312 = vdwg.mxu0
    %v1313 = vmul.f32 %v1310, 0.001953125
    %v1315 = vsel %vm580, %v1313, 0
    %1317 = vmatprep.subr.mxu0 0.0
    %1318 = vmatpush1.msra.mxu0 %v75
    %1319 = vmatprep.subr.mxu0 0.0
    %1320 = vmatpush1.msra.mxu0 0.0
    %1321 = vmatprep.subr.mxu0 0.0
    %1322 = vmatpush1.msra.mxu0 0.0
    %1323 = vmatprep.subr.mxu0 0.0
    %1324 = vmatpush1.msra.mxu0 0.0
    %1325 = vmatprep.subr.mxu0 0.0
    %1326 = vmatpush1.msra.mxu0 0.0
    %1327 = vmatprep.subr.mxu0 0.0
    %1328 = vmatpush1.msra.mxu0 0.0
    %1329 = vmatprep.subr.mxu0 0.0
    %1330 = vmatpush1.msra.mxu0 0.0
    %1331 = vmatprep.subr.mxu0 0.0
    %1332 = vmatpush1.msra.mxu0 0.0
    %1333 = vmatprep.subr.mxu0 0.0
    %1334 = vmatpush1.msra.mxu0 0.0
    %1335 = vmatprep.subr.mxu0 0.0
    %1336 = vmatpush1.msra.mxu0 0.0
    %1337 = vmatprep.subr.mxu0 0.0
    %1338 = vmatpush1.msra.mxu0 0.0
    %1339 = vmatprep.subr.mxu0 0.0
    %1340 = vmatpush1.msra.mxu0 0.0
    %1341 = vmatprep.subr.mxu0 0.0
    %1342 = vmatpush1.msra.mxu0 0.0
    %1343 = vmatprep.subr.mxu0 0.0
    %1344 = vmatpush1.msra.mxu0 0.0
    %1345 = vmatprep.subr.mxu0 0.0
    %1346 = vmatpush1.msra.mxu0 0.0
    %1347 = vmatprep.subr.mxu0 0.0
    %1348 = vmatpush1.msra.mxu0 0.0
    %1349 = vmatprep.subr.mxu0 0.0
    %1350 = vmatpush1.msra.mxu0 0.0
    %1351 = vmatprep.subr.mxu0 0.0
    %1352 = vmatpush1.msra.mxu0 0.0
    %1353 = vmatprep.subr.mxu0 0.0
    %1354 = vmatpush1.msra.mxu0 0.0
    %1355 = vmatprep.subr.mxu0 0.0
    %1356 = vmatpush1.msra.mxu0 0.0
    %1357 = vmatprep.subr.mxu0 0.0
    %1358 = vmatpush1.msra.mxu0 0.0
    %1359 = vmatprep.subr.mxu0 0.0
    %1360 = vmatpush1.msra.mxu0 0.0
    %1361 = vmatprep.subr.mxu0 0.0
    %1362 = vmatpush1.msra.mxu0 0.0
    %1363 = vmatprep.subr.mxu0 0.0
    %1364 = vmatpush1.msra.mxu0 0.0
    %1365 = vmatprep.subr.mxu0 0.0
    %1366 = vmatpush1.msra.mxu0 0.0
    %1367 = vmatprep.subr.mxu0 0.0
    %1368 = vmatpush1.msra.mxu0 0.0
    %1369 = vmatprep.subr.mxu0 0.0
    %1370 = vmatpush1.msra.mxu0 0.0
    %1371 = vmatprep.subr.mxu0 0.0
    %1372 = vmatpush1.msra.mxu0 0.0
    %1373 = vmatprep.subr.mxu0 0.0
    %1374 = vmatpush1.msra.mxu0 0.0
    %1375 = vmatprep.subr.mxu0 0.0
    %1376 = vmatpush1.msra.mxu0 0.0
    %1377 = vmatprep.subr.mxu0 0.0
    %1378 = vmatpush1.msra.mxu0 0.0
    %1379 = vmatprep.subr.mxu0 0.0
    %1380 = vmatpush1.msra.mxu0 0.0
    %1381 = vmatprep.mubr.f32.mxu0 0.0
    %1382 = vmatmul.mubr.f32.gmra.mrb[0].mxu0 %v1315
    %v1383 = vpop.f32.mrb[0].mxu0
    %v1384 = vadd.f32 0.0, %v1383
    %v1385 = vpop.f32.mrb[0].mxu0
    %1386 = vdwg.mxu0
    %v1387 = vlaneseq
    %v1388 = vshrl.u32 %v1387, 7
    %v1389 = vsub.s32 0, %v1388
    %v1390 = vrot.slane %v1384, %v1389
    %v1391 = vsub.f32 %v1216, %v1390
    %v1392 = vsub.f32 %v1221, %v1390
    %v1393 = vsub.f32 %v1226, %v1390
    %v1394 = vsub.f32 %v1231, %v1390
    %v1395 = vmul.f32 %v1391, %v1391
    %v1396 = vmul.f32 %v1392, %v1392
    %v1397 = vmul.f32 %v1393, %v1393
    %v1398 = vmul.f32 %v1394, %v1394
    %v1399 = vadd.f32 %v1395, %v1396
    %v1400 = vadd.f32 %v1399, %v1397
    %v1401 = vadd.f32 %v1400, %v1398
    %v1402 = vrot.slane %v1401, 4
    %v1403 = vadd.f32 %v1401, %v1402
    %v1404 = vrot.slane %v1403, 2
    %v1405 = vadd.f32 %v1403, %v1404
    %v1406 = vrot.slane %v1405, 1
    %v1407 = vadd.f32 %v1405, %v1406
    %1408 = vmatprep.subr.mxu0 0.0
    %1409 = vmatpush1.msra.mxu0 %v59
    %1410 = vmatprep.subr.mxu0 0.0
    %1411 = vmatpush1.msra.mxu0 %v60
    %1412 = vmatprep.subr.mxu0 0.0
    %1413 = vmatpush1.msra.mxu0 %v61
    %1414 = vmatprep.subr.mxu0 0.0
    %1415 = vmatpush1.msra.mxu0 %v62
    %1416 = vmatprep.subr.mxu0 0.0
    %1417 = vmatpush1.msra.mxu0 %v63
    %1418 = vmatprep.subr.mxu0 0.0
    %1419 = vmatpush1.msra.mxu0 %v64
    %1420 = vmatprep.subr.mxu0 0.0
    %1421 = vmatpush1.msra.mxu0 %v65
    %1422 = vmatprep.subr.mxu0 0.0
    %1423 = vmatpush1.msra.mxu0 %v66
    %1424 = vmatprep.subr.mxu0 0.0
    %1425 = vmatpush1.msra.mxu0 %v67
    %1426 = vmatprep.subr.mxu0 0.0
    %1427 = vmatpush1.msra.mxu0 %v68
    %1428 = vmatprep.subr.mxu0 0.0
    %1429 = vmatpush1.msra.mxu0 %v69
    %1430 = vmatprep.subr.mxu0 0.0
    %1431 = vmatpush1.msra.mxu0 %v70
    %1432 = vmatprep.subr.mxu0 0.0
    %1433 = vmatpush1.msra.mxu0 %v71
    %1434 = vmatprep.subr.mxu0 0.0
    %1435 = vmatpush1.msra.mxu0 %v72
    %1436 = vmatprep.subr.mxu0 0.0
    %1437 = vmatpush1.msra.mxu0 %v73
    %1438 = vmatprep.subr.mxu0 0.0
    %1439 = vmatpush1.msra.mxu0 %v74
    %1440 = vmatprep.subr.mxu0 0.0
    %1441 = vmatpush1.msra.mxu0 0.0
    %1442 = vmatprep.subr.mxu0 0.0
    %1443 = vmatpush1.msra.mxu0 0.0
    %1444 = vmatprep.subr.mxu0 0.0
    %1445 = vmatpush1.msra.mxu0 0.0
    %1446 = vmatprep.subr.mxu0 0.0
    %1447 = vmatpush1.msra.mxu0 0.0
    %1448 = vmatprep.subr.mxu0 0.0
    %1449 = vmatpush1.msra.mxu0 0.0
    %1450 = vmatprep.subr.mxu0 0.0
    %1451 = vmatpush1.msra.mxu0 0.0
    %1452 = vmatprep.subr.mxu0 0.0
    %1453 = vmatpush1.msra.mxu0 0.0
    %1454 = vmatprep.subr.mxu0 0.0
    %1455 = vmatpush1.msra.mxu0 0.0
    %1456 = vmatprep.subr.mxu0 0.0
    %1457 = vmatpush1.msra.mxu0 0.0
    %1458 = vmatprep.subr.mxu0 0.0
    %1459 = vmatpush1.msra.mxu0 0.0
    %1460 = vmatprep.subr.mxu0 0.0
    %1461 = vmatpush1.msra.mxu0 0.0
    %1462 = vmatprep.subr.mxu0 0.0
    %1463 = vmatpush1.msra.mxu0 0.0
    %1464 = vmatprep.subr.mxu0 0.0
    %1465 = vmatpush1.msra.mxu0 0.0
    %1466 = vmatprep.subr.mxu0 0.0
    %1467 = vmatpush1.msra.mxu0 0.0
    %1468 = vmatprep.subr.mxu0 0.0
    %1469 = vmatpush1.msra.mxu0 0.0
    %1470 = vmatprep.subr.mxu0 0.0
    %1471 = vmatpush1.msra.mxu0 0.0
    %1472 = vmatprep.mubr.f32.mxu0 0.0
    %1473 = vmatmul.mubr.f32.gmra.mrb[0].mxu0 %v1407
    %v1474 = vpop.f32.mrb[0].mxu0
    %v1475 = vadd.f32 0.0, %v1474
    %v1476 = vpop.f32.mrb[0].mxu0
    %1477 = vdwg.mxu0
    %v1478 = vmul.f32 %v1475, 0.001953125
    %v1480 = vsel %vm580, %v1478, 0
    %1482 = vmatprep.subr.mxu0 0.0
    %1483 = vmatpush1.msra.mxu0 %v75
    %1484 = vmatprep.subr.mxu0 0.0
    %1485 = vmatpush1.msra.mxu0 0.0
    %1486 = vmatprep.subr.mxu0 0.0
    %1487 = vmatpush1.msra.mxu0 0.0
    %1488 = vmatprep.subr.mxu0 0.0
    %1489 = vmatpush1.msra.mxu0 0.0
    %1490 = vmatprep.subr.mxu0 0.0
    %1491 = vmatpush1.msra.mxu0 0.0
    %1492 = vmatprep.subr.mxu0 0.0
    %1493 = vmatpush1.msra.mxu0 0.0
    %1494 = vmatprep.subr.mxu0 0.0
    %1495 = vmatpush1.msra.mxu0 0.0
    %1496 = vmatprep.subr.mxu0 0.0
    %1497 = vmatpush1.msra.mxu0 0.0
    %1498 = vmatprep.subr.mxu0 0.0
    %1499 = vmatpush1.msra.mxu0 0.0
    %1500 = vmatprep.subr.mxu0 0.0
    %1501 = vmatpush1.msra.mxu0 0.0
    %1502 = vmatprep.subr.mxu0 0.0
    %1503 = vmatpush1.msra.mxu0 0.0
    %1504 = vmatprep.subr.mxu0 0.0
    %1505 = vmatpush1.msra.mxu0 0.0
    %1506 = vmatprep.subr.mxu0 0.0
    %1507 = vmatpush1.msra.mxu0 0.0
    %1508 = vmatprep.subr.mxu0 0.0
    %1509 = vmatpush1.msra.mxu0 0.0
    %1510 = vmatprep.subr.mxu0 0.0
    %1511 = vmatpush1.msra.mxu0 0.0
    %1512 = vmatprep.subr.mxu0 0.0
    %1513 = vmatpush1.msra.mxu0 0.0
    %1514 = vmatprep.subr.mxu0 0.0
    %1515 = vmatpush1.msra.mxu0 0.0
    %1516 = vmatprep.subr.mxu0 0.0
    %1517 = vmatpush1.msra.mxu0 0.0
    %1518 = vmatprep.subr.mxu0 0.0
    %1519 = vmatpush1.msra.mxu0 0.0
    %1520 = vmatprep.subr.mxu0 0.0
    %1521 = vmatpush1.msra.mxu0 0.0
    %1522 = vmatprep.subr.mxu0 0.0
    %1523 = vmatpush1.msra.mxu0 0.0
    %1524 = vmatprep.subr.mxu0 0.0
    %1525 = vmatpush1.msra.mxu0 0.0
    %1526 = vmatprep.subr.mxu0 0.0
    %1527 = vmatpush1.msra.mxu0 0.0
    %1528 = vmatprep.subr.mxu0 0.0
    %1529 = vmatpush1.msra.mxu0 0.0
    %1530 = vmatprep.subr.mxu0 0.0
    %1531 = vmatpush1.msra.mxu0 0.0
    %1532 = vmatprep.subr.mxu0 0.0
    %1533 = vmatpush1.msra.mxu0 0.0
    %1534 = vmatprep.subr.mxu0 0.0
    %1535 = vmatpush1.msra.mxu0 0.0
    %1536 = vmatprep.subr.mxu0 0.0
    %1537 = vmatpush1.msra.mxu0 0.0
    %1538 = vmatprep.subr.mxu0 0.0
    %1539 = vmatpush1.msra.mxu0 0.0
    %1540 = vmatprep.subr.mxu0 0.0
    %1541 = vmatpush1.msra.mxu0 0.0
    %1542 = vmatprep.subr.mxu0 0.0
    %1543 = vmatpush1.msra.mxu0 0.0
    %1544 = vmatprep.subr.mxu0 0.0
    %1545 = vmatpush1.msra.mxu0 0.0
    %1546 = vmatprep.mubr.f32.mxu0 0.0
    %1547 = vmatmul.mubr.f32.gmra.mrb[0].mxu0 %v1480
    %v1548 = vpop.f32.mrb[0].mxu0
    %v1549 = vadd.f32 1e-05, %v1548
    %v1550 = vpop.f32.mrb[0].mxu0
    %1551 = vdwg.mxu0
    %v1552 = vrsqrt.pop %v1549
    %v1554 = vrot.slane %v77, 1
    %v1556 = vmul.f32 %v1552, %v1554
    %v1557 = vlaneseq
    %v1558 = vshrl.u32 %v1557, 7
    %v1559 = vsub.s32 0, %v1558
    %v1560 = vrot.slane %v1556, %v1559
    %v1561 = vmul.f32 %v1391, %v1560
    %v1562 = vmul.f32 %v1392, %v1560
    %v1563 = vmul.f32 %v1393, %v1560
    %v1564 = vmul.f32 %v1394, %v1560
    %v1565 = vlaneseq
    %v1566 = vshrl.u32 %v1565, 7
    %v1567 = vsub.s32 1, %v1566
    %v1568 = vrot.slane %v78, %v1567
    %v1569 = vadd.f32 %v1561, %v1568
    %v1570 = vadd.f32 %v1562, %v1568
    %v1571 = vadd.f32 %v1563, %v1568
    %v1572 = vadd.f32 %v1564, %v1568
    %v1573 = vadd.f32 %v1569, %v47
    %v1574 = vadd.f32 %v1570, %v48
    %v1575 = vadd.f32 %v1571, %v49
    %v1576 = vadd.f32 %v1572, %v50
    %1577 = vst [vmem:[#allocation5] sm:$0xff] %v1573
    %1578 = vst [vmem:[#allocation5 + $0x8] sm:$0xff] %v1574
    %1579 = vst [vmem:[#allocation5 + $0x10] sm:$0xff] %v1575
    %1580 = vst [vmem:[#allocation5 + $0x18] sm:$0xff] %v1576
    // Predicated region
    $region42: #{tpu_custom_call.1} parent=1 // pred_check
      _
    $region43: #{tpu_custom_call.1} parent=1 // pred_check_branch
      %1582 = sbr.rel (0) target = $region45
    $region44: #{tpu_custom_call.1} parent=1 // pred_region
      %s1584 = ssub.s32 512, 512
      %1585 = vsyncadd [#allocation4], %s1584
      %s1586 = sshll.u32 [#allocation5], 4
      %s1587 = int_to_ptr.vmem [resolvable:$true] %s1586
      %1592 = dma.vmem_to_hbm [thread:$0]  %s1587, 512, %s9, [#allocation4], 128, 128, 8
    $region45: #{tpu_custom_call.1} parent=1 // pred_fallthru
      _
    // Predicated region
    $region46: #{tpu_custom_call.1} parent=1 // pred_check
      _
    $region47: #{tpu_custom_call.1} parent=1 // pred_check_branch
      %1594 = sbr.rel (0) target = $region49
    $region48: #{tpu_custom_call.1} parent=1 // pred_region
      %1595 = dma.done [#allocation4], 512
    $region49: #{tpu_custom_call.1} parent=1 // pred_fallthru
      _
    %1596 = vsyncpa [#allocation3], 1
    %1597 = vsyncpa [#allocation4], 1

</llo_original>
